<compile_context>
chip_gen: v6e
topology: v6e:2x2x1
jax: 0.10.0
libtpu: 0.0.40
codegen_flags: <defaults>
</compile_context>

<pallas_src>
import functools

import jax
import jax.numpy as jnp
from jax.experimental import pallas as pl
from jax.experimental.pallas import tpu as pltpu  # noqa: F401  (kept for memory-space/scratch use at scale)

EPS = 1e-5  # nn.InstanceNorm2d default eps


def mb2_kernel(xp_ref, w1_ref, w3_ref, p12_ref, p3_ref, o_ref,
               *, ksize, h, w, wp, pad, plane):
    xp = xp_ref[...]                     # (N*c_in, L)  reflection-padded, flattened, zero tail
    w1 = w1_ref[...]                     # (N*c_inner, N*c_in)   block-diag 1x1 expand
    w3 = w3_ref[...]                     # (N*c_out, N*c_inner)  block-diag 1x1 project
    p12 = p12_ref[...]                   # (N*c_inner, 4 + k*k)  packed g1,be1,g2,be2,w2
    p3 = p3_ref[...]                     # (N*c_out, 2)          packed g3,be3

    span = h * wp                        # flat length covering every valid output row
    n_out = h * w                        # valid spatial size after the VALID depthwise conv

    g1, be1 = p12[:, 0:1], p12[:, 1:2]
    g2, be2 = p12[:, 2:3], p12[:, 3:4]
    w2 = p12[:, 4:4 + ksize * ksize]
    g3, be3 = p3[:, 0:1], p3[:, 1:2]

    # 0/1 mask over the h*wp span: 1 on the w valid columns of each wp-wide row.
    col = jax.lax.broadcasted_iota(jnp.int32, (1, span), 1)
    mask = (col % wp < w).astype(jnp.float32)

    # --- conv1: 1x1 pointwise expansion as one MXU matmul (bias cancelled by norm1) ---
    y1 = jnp.dot(w1, xp, preferred_element_type=jnp.float32)            # (N*c_inner, L)
    # norm1 over the padded plane (hp*wp cols). Tail cols of y1 are exactly 0, so
    # full-width lane reductions with denominator `plane` give exact raw moments.
    inv_p = 1.0 / plane
    mu1 = jnp.sum(y1, axis=1, keepdims=True) * inv_p
    var1 = jnp.sum(y1 * y1, axis=1, keepdims=True) * inv_p - mu1 * mu1
    y1 = (y1 - mu1) * (jax.lax.rsqrt(var1 + EPS) * g1) + be1
    # activation_fn1 == 'None' -> identity
    # NOTE: valid depthwise taps only ever read cols < plane, so the normalized garbage
    # in the zero tail (cols >= plane) never reaches a valid output (asserted in wrapper).

    # --- conv2: depthwise k x k, stride 1, VALID, via flat lane-shift slices ---
    # TODO(synk): at larger shapes, express these static-offset slices as pltpu.roll
    # (XLU slot) and hoist the k row-base shifts if the bundle shows relayout copies.
    acc = jnp.zeros((y1.shape[0], span), jnp.float32)
    for dh in range(ksize):
        for dw in range(ksize):
            t = dh * ksize + dw
            off = dh * wp + dw
            acc = acc + y1[:, off:off + span] * w2[:, t:t + 1]

    # --- norm2 (stats over the n_out valid cols via mask; bias b2 cancelled) ---
    inv_n = 1.0 / n_out
    am = acc * mask
    mu2 = jnp.sum(am, axis=1, keepdims=True) * inv_n
    var2 = jnp.sum(am * acc, axis=1, keepdims=True) * inv_n - mu2 * mu2
    y2 = (acc - mu2) * (jax.lax.rsqrt(var2 + EPS) * g2) + be2            # junk cols: garbage (dropped later)
    # activation_fn2 == 'None' -> identity

    # --- conv3: 1x1 pointwise projection as one MXU matmul (bias cancelled by norm3) ---
    y3 = jnp.dot(w3, y2, preferred_element_type=jnp.float32)             # (N*c_out, span)
    y3m = y3 * mask
    mu3 = jnp.sum(y3m, axis=1, keepdims=True) * inv_n
    var3 = jnp.sum(y3m * y3, axis=1, keepdims=True) * inv_n - mu3 * mu3
    y3 = (y3 - mu3) * (jax.lax.rsqrt(var3 + EPS) * g3) + be3

    # --- residual skip (interior window of the padded input) + single final extraction ---
    off0 = pad * wp + pad
    out_full = y3 + xp[:, off0:off0 + span]                              # (N*c_out, span)
    r_out = out_full.shape[0]
    o_ref[...] = out_full.reshape(r_out, h, wp)[:, :, :w].reshape(r_out, n_out)


def prepare_params(params, n, *, ksize=3):
    """One-time packing (hoisted out of the per-call path).

    Conv biases b1/b2/b3 are dropped: a per-channel constant added before an
    InstanceNorm cancels exactly in the mean subtraction.
    """
    (w1, _b1, g1, be1, w2, _b2, g2, be2, w3, _b3, g3, be3) = params
    eye = jnp.eye(n, dtype=jnp.float32)
    w1_bd = jnp.kron(eye, w1)                                         # (n*c_inner, n*c_in)
    w3_bd = jnp.kron(eye, w3)                                         # (n*c_out, n*c_inner)
    p12 = jnp.tile(jnp.concatenate([g1, be1, g2, be2, w2], axis=1), (n, 1))
    p3 = jnp.tile(jnp.concatenate([g3, be3], axis=1), (n, 1))
    return w1_bd, w3_bd, p12, p3


@functools.partial(jax.jit, static_argnames=("ksize",))
def mobile_v2_block(x, w1_bd, w3_bd, p12, p3, *, ksize=3):
    """x: (N, C_in, H, W) float32 (NCHW, same as PyTorch). Prepared params from prepare_params."""
    n, c_in, h, w = x.shape
    c_out = w3_bd.shape[0] // n
    assert w1_bd.shape[1] == n * c_in
    assert c_in == c_out, "use_skip_connection requires in_channels == out_channels"
    pad = ksize // 2
    hp, wp = h + 2 * pad, w + 2 * pad
    plane = hp * wp
    span = h * wp

    # Invariant: valid depthwise taps never read past the valid padded plane
    # (so the post-norm1 garbage in the zero tail cannot leak into valid outputs).
    assert (h + 2 * pad - 1) * wp + (w + 2 * pad - 1) < plane, "depthwise tap would read garbage tail"

    # Flat width: must hold the padded plane and the farthest tap slice; lane-align to 128.
    need = max(plane, (ksize - 1) * (wp + 1) + span)
    L = ((need + 127) // 128) * 128

    # Reflection pad (index glue), flatten spatial, zero-pad the tail, fold batch into sublanes.
    xp = jnp.pad(x, ((0, 0), (0, 0), (pad, pad), (pad, pad)), mode="reflect")
    xp = xp.reshape(n, c_in, plane)
    xp = jnp.pad(xp, ((0, 0), (0, 0), (0, L - plane)))
    xp = xp.reshape(n * c_in, L)

    out = pl.pallas_call(
        functools.partial(mb2_kernel, ksize=ksize, h=h, w=w, wp=wp, pad=pad, plane=plane),
        out_shape=jax.ShapeDtypeStruct((n * c_out, h * w), jnp.float32),
    )(xp, w1_bd, w3_bd, p12, p3)
    return out.reshape(n, c_out, h, w)


def init_params(key, in_channels, out_channels, ksize=3, expansion_factor=6):
    inner = in_channels * expansion_factor
    ks = jax.random.split(key, 6)
    w1 = 0.1 * jax.random.normal(ks[0], (inner, in_channels), jnp.float32)
    b1 = 0.1 * jax.random.normal(ks[1], (inner, 1), jnp.float32)
    w2 = 0.1 * jax.random.normal(ks[2], (inner, ksize * ksize), jnp.float32)
    b2 = 0.1 * jax.random.normal(ks[3], (inner, 1), jnp.float32)
    w3 = 0.1 * jax.random.normal(ks[4], (out_channels, inner), jnp.float32)
    b3 = 0.1 * jax.random.normal(ks[5], (out_channels, 1), jnp.float32)
    # InstanceNorm2d(affine=True) defaults: weight=1, bias=0
    g1, be1 = jnp.ones((inner, 1), jnp.float32), jnp.zeros((inner, 1), jnp.float32)
    g2, be2 = jnp.ones((inner, 1), jnp.float32), jnp.zeros((inner, 1), jnp.float32)
    g3, be3 = jnp.ones((out_channels, 1), jnp.float32), jnp.zeros((out_channels, 1), jnp.float32)
    return (w1, b1, g1, be1, w2, b2, g2, be2, w3, b3, g3, be3)


def reference(x, params, ksize=3):
    """Pure-JAX reference mirroring the PyTorch forward pass (including the conv biases)."""
    (w1, b1, g1, be1, w2, b2, g2, be2, w3, b3, g3, be3) = params
    pad = ksize // 2
    inner = w1.shape[0]
    xp = jnp.pad(x, ((0, 0), (0, 0), (pad, pad), (pad, pad)), mode="reflect")

    def inorm(y, g, b):
        mu = jnp.mean(y, axis=(2, 3), keepdims=True)
        var = jnp.mean((y - mu) ** 2, axis=(2, 3), keepdims=True)
        return (y - mu) / jnp.sqrt(var + EPS) * g.reshape(1, -1, 1, 1) + b.reshape(1, -1, 1, 1)

    y = jnp.einsum("nihw,oi->nohw", xp, w1) + b1.reshape(1, -1, 1, 1)
    y = inorm(y, g1, be1)
    w2k = w2.reshape(inner, 1, ksize, ksize)
    y = jax.lax.conv_general_dilated(
        y, w2k, window_strides=(1, 1), padding="VALID",
        feature_group_count=inner,
        dimension_numbers=("NCHW", "OIHW", "NCHW")) + b2.reshape(1, -1, 1, 1)
    y = inorm(y, g2, be2)
    y = jnp.einsum("nihw,oi->nohw", y, w3) + b3.reshape(1, -1, 1, 1)
    y = inorm(y, g3, be3)
    return y + x


if __name__ == "__main__":
    key = jax.random.PRNGKey(0)
    kx, kp = jax.random.split(key)
    N, C, H, W = 2, 4, 16, 16       # in_channels == out_channels (skip connection)
    x = jax.random.normal(kx, (N, C, H, W), jnp.float32)
    params = init_params(kp, C, C, ksize=3, expansion_factor=6)

    prepped = prepare_params(params, N, ksize=3)        # one-time packing, outside the hot path
    out = mobile_v2_block(x, *prepped, ksize=3)
    out = jax.block_until_ready(out)

    ref = reference(x, params, ksize=3)
    assert out.shape == (N, C, H, W)
    # Tolerance covers MXU f32 matmuls vs XLA default-precision einsums and one-pass variance.
    assert jnp.allclose(out, ref, atol=1e-3, rtol=1e-3), float(jnp.max(jnp.abs(out - ref)))
    print("KERNEL_OK")
</pallas_src>

<mosaic_0001>
module attributes {stable_mosaic.version = 11 : i64} {
  func.func @mb2_kernel(%arg0: memref<8x384xf32, #tpu.memory_space<vmem>>, %arg1: memref<48x8xf32, #tpu.memory_space<vmem>>, %arg2: memref<8x48xf32, #tpu.memory_space<vmem>>, %arg3: memref<48x13xf32, #tpu.memory_space<vmem>>, %arg4: memref<8x2xf32, #tpu.memory_space<vmem>>, %arg5: memref<8x256xf32, #tpu.memory_space<vmem>>) attributes {dimension_semantics = [], scalar_prefetch = 0 : i64, scratch_operands = 0 : i64, tpu.core_type = #tpu.core_type<tc>} {
    %c0 = arith.constant 0 : index
    %c0_0 = arith.constant 0 : index
    %0 = vector.load %arg0[%c0, %c0_0] : memref<8x384xf32, #tpu.memory_space<vmem>>, vector<8x384xf32>
    %c0_1 = arith.constant 0 : index
    %c0_2 = arith.constant 0 : index
    %1 = vector.load %arg1[%c0_1, %c0_2] : memref<48x8xf32, #tpu.memory_space<vmem>>, vector<48x8xf32>
    %c0_3 = arith.constant 0 : index
    %c0_4 = arith.constant 0 : index
    %2 = vector.load %arg2[%c0_3, %c0_4] : memref<8x48xf32, #tpu.memory_space<vmem>>, vector<8x48xf32>
    %c0_5 = arith.constant 0 : index
    %c0_6 = arith.constant 0 : index
    %3 = vector.load %arg3[%c0_5, %c0_6] : memref<48x13xf32, #tpu.memory_space<vmem>>, vector<48x13xf32>
    %c0_7 = arith.constant 0 : index
    %c0_8 = arith.constant 0 : index
    %4 = vector.load %arg4[%c0_7, %c0_8] : memref<8x2xf32, #tpu.memory_space<vmem>>, vector<8x2xf32>
    %5 = vector.extract_strided_slice %3 {offsets = [0, 0], sizes = [48, 1], strides = [1, 1]} : vector<48x13xf32> to vector<48x1xf32>
    %6 = vector.extract_strided_slice %3 {offsets = [0, 1], sizes = [48, 1], strides = [1, 1]} : vector<48x13xf32> to vector<48x1xf32>
    %7 = vector.extract_strided_slice %3 {offsets = [0, 2], sizes = [48, 1], strides = [1, 1]} : vector<48x13xf32> to vector<48x1xf32>
    %8 = vector.extract_strided_slice %3 {offsets = [0, 3], sizes = [48, 1], strides = [1, 1]} : vector<48x13xf32> to vector<48x1xf32>
    %9 = vector.extract_strided_slice %3 {offsets = [0, 4], sizes = [48, 9], strides = [1, 1]} : vector<48x13xf32> to vector<48x9xf32>
    %10 = vector.extract_strided_slice %4 {offsets = [0, 0], sizes = [8, 1], strides = [1, 1]} : vector<8x2xf32> to vector<8x1xf32>
    %11 = vector.extract_strided_slice %4 {offsets = [0, 1], sizes = [8, 1], strides = [1, 1]} : vector<8x2xf32> to vector<8x1xf32>
    %12 = tpu.iota {dimensions = array<i32: 1>} : vector<1x288xi32>
    %c18_i32 = arith.constant 18 : i32
    %c0_i32 = arith.constant 0 : i32
    %13 = arith.cmpi eq, %c18_i32, %c0_i32 : i32
    %c1_i32 = arith.constant 1 : i32
    %14 = arith.select %13, %c1_i32, %c18_i32 : i32
    %15 = vector.broadcast %14 : i32 to vector<1x288xi32>
    %16 = arith.remsi %12, %15 : vector<1x288xi32>
    %c0_i32_9 = arith.constant 0 : i32
    %17 = vector.broadcast %c0_i32_9 : i32 to vector<1x288xi32>
    %18 = arith.cmpi ne, %16, %17 : vector<1x288xi32>
    %c0_i32_10 = arith.constant 0 : i32
    %19 = vector.broadcast %c0_i32_10 : i32 to vector<1x288xi32>
    %20 = arith.cmpi slt, %16, %19 : vector<1x288xi32>
    %c0_i32_11 = arith.constant 0 : i32
    %21 = arith.cmpi slt, %14, %c0_i32_11 : i32
    %22 = vector.broadcast %21 : i1 to vector<1x288xi1>
    %23 = vector.broadcast %22 : vector<1x288xi1> to vector<1x288xi1>
    %24 = arith.xori %20, %23 : vector<1x288xi1>
    %25 = arith.andi %24, %18 : vector<1x288xi1>
    %26 = vector.broadcast %14 : i32 to vector<1x288xi32>
    %27 = arith.addi %16, %26 : vector<1x288xi32>
    %28 = arith.select %25, %27, %16 : vector<1x288xi1>, vector<1x288xi32>
    %c16_i32 = arith.constant 16 : i32
    %29 = vector.broadcast %c16_i32 : i32 to vector<1x288xi32>
    %30 = arith.cmpi slt, %28, %29 : vector<1x288xi32>
    %31 = arith.extui %30 : vector<1x288xi1> to vector<1x288xi32>
    %32 = arith.sitofp %31 : vector<1x288xi32> to vector<1x288xf32>
    %cst = arith.constant dense<0.000000e+00> : vector<48x384xf32>
    %33 = tpu.matmul %1, %0, %cst {dimension_numbers = #tpu.dot_dimension_numbers<[1], [0], [0], [1], [0, 0, 1, 1], [], []>} : vector<48x8xf32>, vector<8x384xf32>, vector<48x384xf32> -> vector<48x384xf32>
    %cst_12 = arith.constant dense<0.000000e+00> : vector<48xf32>
    %34 = vector.multi_reduction <add>, %33, %cst_12 [1] : vector<48x384xf32> to vector<48xf32>
    %35 = vector.shape_cast %34 : vector<48xf32> to vector<48x1xf32>
    %cst_13 = arith.constant 0.00308641978 : f32
    %36 = vector.broadcast %cst_13 : f32 to vector<48x1xf32>
    %37 = arith.mulf %35, %36 : vector<48x1xf32>
    %38 = arith.mulf %33, %33 : vector<48x384xf32>
    %cst_14 = arith.constant dense<0.000000e+00> : vector<48xf32>
    %39 = vector.multi_reduction <add>, %38, %cst_14 [1] : vector<48x384xf32> to vector<48xf32>
    %40 = vector.shape_cast %39 : vector<48xf32> to vector<48x1xf32>
    %cst_15 = arith.constant 0.00308641978 : f32
    %41 = vector.broadcast %cst_15 : f32 to vector<48x1xf32>
    %42 = arith.mulf %40, %41 : vector<48x1xf32>
    %43 = arith.mulf %37, %37 : vector<48x1xf32>
    %44 = arith.subf %42, %43 : vector<48x1xf32>
    %45 = vector.broadcast %37 : vector<48x1xf32> to vector<48x384xf32>
    %46 = arith.subf %33, %45 : vector<48x384xf32>
    %cst_16 = arith.constant 9.99999974E-6 : f32
    %47 = vector.broadcast %cst_16 : f32 to vector<48x1xf32>
    %48 = arith.addf %44, %47 : vector<48x1xf32>
    %49 = math.rsqrt %48 : vector<48x1xf32>
    %50 = arith.mulf %49, %5 : vector<48x1xf32>
    %51 = vector.broadcast %50 : vector<48x1xf32> to vector<48x384xf32>
    %52 = arith.mulf %46, %51 : vector<48x384xf32>
    %53 = vector.broadcast %6 : vector<48x1xf32> to vector<48x384xf32>
    %54 = arith.addf %52, %53 : vector<48x384xf32>
    %cst_17 = arith.constant 0.000000e+00 : f32
    %55 = vector.broadcast %cst_17 : f32 to vector<48x288xf32>
    %56 = vector.extract_strided_slice %54 {offsets = [0, 0], sizes = [48, 288], strides = [1, 1]} : vector<48x384xf32> to vector<48x288xf32>
    %57 = vector.extract_strided_slice %9 {offsets = [0, 0], sizes = [48, 1], strides = [1, 1]} : vector<48x9xf32> to vector<48x1xf32>
    %58 = vector.broadcast %57 : vector<48x1xf32> to vector<48x288xf32>
    %59 = arith.mulf %56, %58 : vector<48x288xf32>
    %60 = arith.addf %55, %59 : vector<48x288xf32>
    %61 = vector.extract_strided_slice %54 {offsets = [0, 1], sizes = [48, 288], strides = [1, 1]} : vector<48x384xf32> to vector<48x288xf32>
    %62 = vector.extract_strided_slice %9 {offsets = [0, 1], sizes = [48, 1], strides = [1, 1]} : vector<48x9xf32> to vector<48x1xf32>
    %63 = vector.broadcast %62 : vector<48x1xf32> to vector<48x288xf32>
    %64 = arith.mulf %61, %63 : vector<48x288xf32>
    %65 = arith.addf %60, %64 : vector<48x288xf32>
    %66 = vector.extract_strided_slice %54 {offsets = [0, 2], sizes = [48, 288], strides = [1, 1]} : vector<48x384xf32> to vector<48x288xf32>
    %67 = vector.extract_strided_slice %9 {offsets = [0, 2], sizes = [48, 1], strides = [1, 1]} : vector<48x9xf32> to vector<48x1xf32>
    %68 = vector.broadcast %67 : vector<48x1xf32> to vector<48x288xf32>
    %69 = arith.mulf %66, %68 : vector<48x288xf32>
    %70 = arith.addf %65, %69 : vector<48x288xf32>
    %71 = vector.extract_strided_slice %54 {offsets = [0, 18], sizes = [48, 288], strides = [1, 1]} : vector<48x384xf32> to vector<48x288xf32>
    %72 = vector.extract_strided_slice %9 {offsets = [0, 3], sizes = [48, 1], strides = [1, 1]} : vector<48x9xf32> to vector<48x1xf32>
    %73 = vector.broadcast %72 : vector<48x1xf32> to vector<48x288xf32>
    %74 = arith.mulf %71, %73 : vector<48x288xf32>
    %75 = arith.addf %70, %74 : vector<48x288xf32>
    %76 = vector.extract_strided_slice %54 {offsets = [0, 19], sizes = [48, 288], strides = [1, 1]} : vector<48x384xf32> to vector<48x288xf32>
    %77 = vector.extract_strided_slice %9 {offsets = [0, 4], sizes = [48, 1], strides = [1, 1]} : vector<48x9xf32> to vector<48x1xf32>
    %78 = vector.broadcast %77 : vector<48x1xf32> to vector<48x288xf32>
    %79 = arith.mulf %76, %78 : vector<48x288xf32>
    %80 = arith.addf %75, %79 : vector<48x288xf32>
    %81 = vector.extract_strided_slice %54 {offsets = [0, 20], sizes = [48, 288], strides = [1, 1]} : vector<48x384xf32> to vector<48x288xf32>
    %82 = vector.extract_strided_slice %9 {offsets = [0, 5], sizes = [48, 1], strides = [1, 1]} : vector<48x9xf32> to vector<48x1xf32>
    %83 = vector.broadcast %82 : vector<48x1xf32> to vector<48x288xf32>
    %84 = arith.mulf %81, %83 : vector<48x288xf32>
    %85 = arith.addf %80, %84 : vector<48x288xf32>
    %86 = vector.extract_strided_slice %54 {offsets = [0, 36], sizes = [48, 288], strides = [1, 1]} : vector<48x384xf32> to vector<48x288xf32>
    %87 = vector.extract_strided_slice %9 {offsets = [0, 6], sizes = [48, 1], strides = [1, 1]} : vector<48x9xf32> to vector<48x1xf32>
    %88 = vector.broadcast %87 : vector<48x1xf32> to vector<48x288xf32>
    %89 = arith.mulf %86, %88 : vector<48x288xf32>
    %90 = arith.addf %85, %89 : vector<48x288xf32>
    %91 = vector.extract_strided_slice %54 {offsets = [0, 37], sizes = [48, 288], strides = [1, 1]} : vector<48x384xf32> to vector<48x288xf32>
    %92 = vector.extract_strided_slice %9 {offsets = [0, 7], sizes = [48, 1], strides = [1, 1]} : vector<48x9xf32> to vector<48x1xf32>
    %93 = vector.broadcast %92 : vector<48x1xf32> to vector<48x288xf32>
    %94 = arith.mulf %91, %93 : vector<48x288xf32>
    %95 = arith.addf %90, %94 : vector<48x288xf32>
    %96 = vector.extract_strided_slice %54 {offsets = [0, 38], sizes = [48, 288], strides = [1, 1]} : vector<48x384xf32> to vector<48x288xf32>
    %97 = vector.extract_strided_slice %9 {offsets = [0, 8], sizes = [48, 1], strides = [1, 1]} : vector<48x9xf32> to vector<48x1xf32>
    %98 = vector.broadcast %97 : vector<48x1xf32> to vector<48x288xf32>
    %99 = arith.mulf %96, %98 : vector<48x288xf32>
    %100 = arith.addf %95, %99 : vector<48x288xf32>
    %101 = vector.broadcast %32 : vector<1x288xf32> to vector<48x288xf32>
    %102 = arith.mulf %100, %101 : vector<48x288xf32>
    %cst_18 = arith.constant dense<0.000000e+00> : vector<48xf32>
    %103 = vector.multi_reduction <add>, %102, %cst_18 [1] : vector<48x288xf32> to vector<48xf32>
    %104 = vector.shape_cast %103 : vector<48xf32> to vector<48x1xf32>
    %cst_19 = arith.constant 3.906250e-03 : f32
    %105 = vector.broadcast %cst_19 : f32 to vector<48x1xf32>
    %106 = arith.mulf %104, %105 : vector<48x1xf32>
    %107 = arith.mulf %102, %100 : vector<48x288xf32>
    %cst_20 = arith.constant dense<0.000000e+00> : vector<48xf32>
    %108 = vector.multi_reduction <add>, %107, %cst_20 [1] : vector<48x288xf32> to vector<48xf32>
    %109 = vector.shape_cast %108 : vector<48xf32> to vector<48x1xf32>
    %cst_21 = arith.constant 3.906250e-03 : f32
    %110 = vector.broadcast %cst_21 : f32 to vector<48x1xf32>
    %111 = arith.mulf %109, %110 : vector<48x1xf32>
    %112 = arith.mulf %106, %106 : vector<48x1xf32>
    %113 = arith.subf %111, %112 : vector<48x1xf32>
    %114 = vector.broadcast %106 : vector<48x1xf32> to vector<48x288xf32>
    %115 = arith.subf %100, %114 : vector<48x288xf32>
    %cst_22 = arith.constant 9.99999974E-6 : f32
    %116 = vector.broadcast %cst_22 : f32 to vector<48x1xf32>
    %117 = arith.addf %113, %116 : vector<48x1xf32>
    %118 = math.rsqrt %117 : vector<48x1xf32>
    %119 = arith.mulf %118, %7 : vector<48x1xf32>
    %120 = vector.broadcast %119 : vector<48x1xf32> to vector<48x288xf32>
    %121 = arith.mulf %115, %120 : vector<48x288xf32>
    %122 = vector.broadcast %8 : vector<48x1xf32> to vector<48x288xf32>
    %123 = arith.addf %121, %122 : vector<48x288xf32>
    %cst_23 = arith.constant dense<0.000000e+00> : vector<8x288xf32>
    %124 = tpu.matmul %2, %123, %cst_23 {dimension_numbers = #tpu.dot_dimension_numbers<[1], [0], [0], [1], [0, 0, 1, 1], [], []>} : vector<8x48xf32>, vector<48x288xf32>, vector<8x288xf32> -> vector<8x288xf32>
    %125 = vector.broadcast %32 : vector<1x288xf32> to vector<8x288xf32>
    %126 = arith.mulf %124, %125 : vector<8x288xf32>
    %cst_24 = arith.constant dense<0.000000e+00> : vector<8xf32>
    %127 = vector.multi_reduction <add>, %126, %cst_24 [1] : vector<8x288xf32> to vector<8xf32>
    %128 = vector.shape_cast %127 : vector<8xf32> to vector<8x1xf32>
    %cst_25 = arith.constant 3.906250e-03 : f32
    %129 = vector.broadcast %cst_25 : f32 to vector<8x1xf32>
    %130 = arith.mulf %128, %129 : vector<8x1xf32>
    %131 = arith.mulf %126, %124 : vector<8x288xf32>
    %cst_26 = arith.constant dense<0.000000e+00> : vector<8xf32>
    %132 = vector.multi_reduction <add>, %131, %cst_26 [1] : vector<8x288xf32> to vector<8xf32>
    %133 = vector.shape_cast %132 : vector<8xf32> to vector<8x1xf32>
    %cst_27 = arith.constant 3.906250e-03 : f32
    %134 = vector.broadcast %cst_27 : f32 to vector<8x1xf32>
    %135 = arith.mulf %133, %134 : vector<8x1xf32>
    %136 = arith.mulf %130, %130 : vector<8x1xf32>
    %137 = arith.subf %135, %136 : vector<8x1xf32>
    %138 = vector.broadcast %130 : vector<8x1xf32> to vector<8x288xf32>
    %139 = arith.subf %124, %138 : vector<8x288xf32>
    %cst_28 = arith.constant 9.99999974E-6 : f32
    %140 = vector.broadcast %cst_28 : f32 to vector<8x1xf32>
    %141 = arith.addf %137, %140 : vector<8x1xf32>
    %142 = math.rsqrt %141 : vector<8x1xf32>
    %143 = arith.mulf %142, %10 : vector<8x1xf32>
    %144 = vector.broadcast %143 : vector<8x1xf32> to vector<8x288xf32>
    %145 = arith.mulf %139, %144 : vector<8x288xf32>
    %146 = vector.broadcast %11 : vector<8x1xf32> to vector<8x288xf32>
    %147 = arith.addf %145, %146 : vector<8x288xf32>
    %148 = vector.extract_strided_slice %0 {offsets = [0, 19], sizes = [8, 288], strides = [1, 1]} : vector<8x384xf32> to vector<8x288xf32>
    %149 = arith.addf %147, %148 : vector<8x288xf32>
    %150 = vector.shape_cast %149 : vector<8x288xf32> to vector<8x16x18xf32>
    %151 = vector.extract_strided_slice %150 {offsets = [0, 0, 0], sizes = [8, 16, 16], strides = [1, 1, 1]} : vector<8x16x18xf32> to vector<8x16x16xf32>
    %152 = vector.shape_cast %151 : vector<8x16x16xf32> to vector<8x256xf32>
    %c0_29 = arith.constant 0 : index
    %c0_30 = arith.constant 0 : index
    %153 = vector.load %arg5[%c0_29, %c0_30] : memref<8x256xf32, #tpu.memory_space<vmem>>, vector<8x256xf32>
    tpu.vector_store %arg5[%c0_29, %c0_30], %152 {strides = array<i32>} : memref<8x256xf32, #tpu.memory_space<vmem>>, vector<8x256xf32>,
    return
  }
}

</mosaic_0001>

<llo_original>
// kernel: mobile_v2_block.1
$region0: #{mobile_v2_block.1}
  #allocation0 [shape = 'u32[]', space=smem, size = 0x4, offset = 0x4, fixed_abs, tag = 'smem constant byte address 0x4 - core index']
  #allocation1 [shape = 'u32[144,128]{1,0:T(1,128)}', space=vmem, size = 0x12000, scoped, tag = 'internal scratch']
  %s0 = inlined_call_operand.vmem [shape: f32[8,384], index: 0, kind: input, shape index: {}]
  %s1 = inlined_call_operand.vmem [shape: f32[48,8], index: 1, kind: input, shape index: {}]
  %s2 = inlined_call_operand.vmem [shape: f32[8,48], index: 2, kind: input, shape index: {}]
  %s3 = inlined_call_operand.vmem [shape: f32[48,13], index: 3, kind: input, shape index: {}]
  %s4 = inlined_call_operand.vmem [shape: f32[8,2], index: 4, kind: input, shape index: {}]
  %s5 = inlined_call_operand.vmem [shape: f32[8,256], index: 5, kind: output, shape index: {}]
  %s6 = sld [smem:[#allocation0]]
  $region30: #{mobile_v2_block.1} parent=0
    _
  %s8 = ssub.s32 1, %s6
  %s9 = scalar_select 0, %s8, %s6
  // Predicated region
  $region2: #{mobile_v2_block.1} parent=0 // pred_check
    _
  $region3: #{mobile_v2_block.1} parent=0 // pred_check_branch
    %11 = sbr.rel (0) target = $region5
  $region4: #{mobile_v2_block.1} parent=0 // pred_region
    _
  $region5: #{mobile_v2_block.1} parent=0 // pred_fallthru
    _
  // Predicated region
  $region6: #{mobile_v2_block.1} parent=0 // pred_check
    _
  $region7: #{mobile_v2_block.1} parent=0 // pred_check_branch
    %13 = sbr.rel (0) target = $region9
  $region8: #{mobile_v2_block.1} parent=0 // pred_region
    _
  $region9: #{mobile_v2_block.1} parent=0 // pred_fallthru
    _
  // Predicated region
  $region10: #{mobile_v2_block.1} parent=0 // pred_check
    _
  $region11: #{mobile_v2_block.1} parent=0 // pred_check_branch
    %15 = sbr.rel (0) target = $region13
  $region12: #{mobile_v2_block.1} parent=0 // pred_region
    _
  $region13: #{mobile_v2_block.1} parent=0 // pred_fallthru
    _
  // Predicated region
  $region14: #{mobile_v2_block.1} parent=0 // pred_check
    _
  $region15: #{mobile_v2_block.1} parent=0 // pred_check_branch
    %17 = sbr.rel (0) target = $region17
  $region16: #{mobile_v2_block.1} parent=0 // pred_region
    _
  $region17: #{mobile_v2_block.1} parent=0 // pred_fallthru
    _
  // Predicated region
  $region18: #{mobile_v2_block.1} parent=0 // pred_check
    _
  $region19: #{mobile_v2_block.1} parent=0 // pred_check_branch
    %19 = sbr.rel (0) target = $region21
  $region20: #{mobile_v2_block.1} parent=0 // pred_region
    _
  $region21: #{mobile_v2_block.1} parent=0 // pred_fallthru
    _
  %v20 = vld [vmem:[%s0] sm:$0xff]
  %v21 = vld [vmem:[%s0 + $0x8] sm:$0xff]
  %v22 = vld [vmem:[%s0 + $0x10] sm:$0xff]
  %v23 = vld [vmem:[%s1] sm:$0xff]
  %v24 = vld [vmem:[%s1 + $0x8] sm:$0xff]
  %v25 = vld [vmem:[%s1 + $0x10] sm:$0xff]
  %v26 = vld [vmem:[%s1 + $0x18] sm:$0xff]
  %v27 = vld [vmem:[%s1 + $0x20] sm:$0xff]
  %v28 = vld [vmem:[%s1 + $0x28] sm:$0xff]
  %v29 = vld [vmem:[%s2] sm:$0xff]
  %v30 = vld [vmem:[%s3] sm:$0xff]
  %v31 = vld [vmem:[%s3 + $0x8] sm:$0xff]
  %v32 = vld [vmem:[%s3 + $0x10] sm:$0xff]
  %v33 = vld [vmem:[%s3 + $0x18] sm:$0xff]
  %v34 = vld [vmem:[%s3 + $0x20] sm:$0xff]
  %v35 = vld [vmem:[%s3 + $0x28] sm:$0xff]
  %v36 = vld [vmem:[%s4] sm:$0xff]
  %v37 = vlaneseq
  %v38 = vand.u32 %v37, 127
  %v39 = vadd.s32 %v38, 128
  %v40 = vadd.s32 %v38, 256
  %vm41 = vcmp.lt.s32.totalorder %v38, 0
  %v42 = vsub.s32 0, %v38
  %v43 = vsel %vm41, %v42, %v38
  %v44 = vmul.u32.u64.compose %v43, 3817748708
  %v45 = vextract.low.u32 %v44
  %v46 = vextract.high.u32 %v44
  %v47 = vshrl.u32 %v46, 4
  %v48 = vmul.u32 %v47, 18
  %v49 = vsub.s32 %v43, %v48
  %v50 = vsub.s32 0, %v49
  %v51 = vsel %vm41, %v50, %v49
  %vm52 = vcmp.lt.s32.totalorder %v39, 0
  %v53 = vsub.s32 0, %v39
  %v54 = vsel %vm52, %v53, %v39
  %v55 = vmul.u32.u64.compose %v54, 3817748708
  %v56 = vextract.low.u32 %v55
  %v57 = vextract.high.u32 %v55
  %v58 = vshrl.u32 %v57, 4
  %v59 = vmul.u32 %v58, 18
  %v60 = vsub.s32 %v54, %v59
  %v61 = vsub.s32 0, %v60
  %v62 = vsel %vm52, %v61, %v60
  %vm63 = vcmp.lt.s32.totalorder %v40, 0
  %v64 = vsub.s32 0, %v40
  %v65 = vsel %vm63, %v64, %v40
  %v66 = vmul.u32.u64.compose %v65, 3817748708
  %v67 = vextract.low.u32 %v66
  %v68 = vextract.high.u32 %v66
  %v69 = vshrl.u32 %v68, 4
  %v70 = vmul.u32 %v69, 18
  %v71 = vsub.s32 %v65, %v70
  %v72 = vsub.s32 0, %v71
  %v73 = vsel %vm63, %v72, %v71
  %vm74 = vcmp.ne.s32.totalorder %v51, 0
  %vm75 = vcmp.ne.s32.totalorder %v62, 0
  %vm76 = vcmp.ne.s32.totalorder %v73, 0
  %vm77 = vcmp.lt.s32.totalorder %v51, 0
  %vm78 = vcmp.lt.s32.totalorder %v62, 0
  %vm79 = vcmp.lt.s32.totalorder %v73, 0
  %vm80 = vmand %vm77, %vm74
  %vm81 = vmand %vm78, %vm75
  %vm82 = vmand %vm79, %vm76
  %v83 = vadd.s32 %v51, 18
  %v84 = vadd.s32 %v62, 18
  %v85 = vadd.s32 %v73, 18
  %v86 = vsel %vm80, %v83, %v51
  %v87 = vsel %vm81, %v84, %v62
  %v88 = vsel %vm82, %v85, %v73
  %vm89 = vcmp.lt.s32.totalorder %v86, 16
  %vm90 = vcmp.lt.s32.totalorder %v87, 16
  %vm91 = vcmp.lt.s32.totalorder %v88, 16
  %v92 = vsel %vm89, 1, 0
  %v93 = vsel %vm90, 1, 0
  %v94 = vsel %vm91, 1, 0
  %v95 = vcvt.s32.f32 %v92
  %v96 = vcvt.s32.f32 %v93
  %v97 = vcvt.s32.f32 %v94
  %vm98 = vcmask 64512
  %v100 = vsel %vm98, %v23, 0
  %v103 = vsel %vm98, %v24, 0
  %v106 = vsel %vm98, %v25, 0
  %v109 = vsel %vm98, %v26, 0
  %v112 = vsel %vm98, %v27, 0
  %v115 = vsel %vm98, %v28, 0
  %117 = vmatprep.subr.mxu0 0.0
  %118 = vmatpush1.msra.mxu0 0.0
  %119 = vmatprep.subr.mxu0 0.0
  %120 = vmatpush1.msra.mxu0 0.0
  %121 = vmatprep.subr.mxu0 0.0
  %122 = vmatpush1.msra.mxu0 0.0
  %123 = vmatprep.subr.mxu0 0.0
  %124 = vmatpush1.msra.mxu0 0.0
  %125 = vmatprep.subr.mxu0 0.0
  %126 = vmatpush1.msra.mxu0 0.0
  %127 = vmatprep.subr.mxu0 0.0
  %128 = vmatpush1.msra.mxu0 0.0
  %129 = vmatprep.subr.mxu0 0.0
  %130 = vmatpush1.msra.mxu0 0.0
  %131 = vmatprep.subr.mxu0 0.0
  %132 = vmatpush1.msra.mxu0 0.0
  %133 = vmatprep.subr.mxu0 0.0
  %134 = vmatpush1.msra.mxu0 0.0
  %135 = vmatprep.subr.mxu0 0.0
  %136 = vmatpush1.msra.mxu0 0.0
  %137 = vmatprep.subr.mxu0 0.0
  %138 = vmatpush1.msra.mxu0 0.0
  %139 = vmatprep.subr.mxu0 0.0
  %140 = vmatpush1.msra.mxu0 0.0
  %141 = vmatprep.subr.mxu0 0.0
  %142 = vmatpush1.msra.mxu0 0.0
  %143 = vmatprep.subr.mxu0 0.0
  %144 = vmatpush1.msra.mxu0 0.0
  %145 = vmatprep.subr.mxu0 0.0
  %146 = vmatpush1.msra.mxu0 0.0
  %147 = vmatprep.subr.mxu0 %v21
  %148 = vmatpush1.msra.mxu0 %v20
  %149 = vmatprep.subr.mxu0 0.0
  %150 = vmatpush2.msra.mxu0 0.0
  %151 = vmatprep.subr.mxu0 0.0
  %152 = vmatpush2.msra.mxu0 0.0
  %153 = vmatprep.subr.mxu0 0.0
  %154 = vmatpush2.msra.mxu0 0.0
  %155 = vmatprep.subr.mxu0 0.0
  %156 = vmatpush2.msra.mxu0 0.0
  %157 = vmatprep.subr.mxu0 0.0
  %158 = vmatpush2.msra.mxu0 0.0
  %159 = vmatprep.subr.mxu0 0.0
  %160 = vmatpush2.msra.mxu0 0.0
  %161 = vmatprep.subr.mxu0 0.0
  %162 = vmatpush2.msra.mxu0 0.0
  %163 = vmatprep.subr.mxu0 0.0
  %164 = vmatpush2.msra.mxu0 0.0
  %165 = vmatprep.subr.mxu0 0.0
  %166 = vmatpush2.msra.mxu0 0.0
  %167 = vmatprep.subr.mxu0 0.0
  %168 = vmatpush2.msra.mxu0 0.0
  %169 = vmatprep.subr.mxu0 0.0
  %170 = vmatpush2.msra.mxu0 0.0
  %171 = vmatprep.subr.mxu0 0.0
  %172 = vmatpush2.msra.mxu0 0.0
  %173 = vmatprep.subr.mxu0 0.0
  %174 = vmatpush2.msra.mxu0 0.0
  %175 = vmatprep.subr.mxu0 0.0
  %176 = vmatpush2.msra.mxu0 0.0
  %177 = vmatprep.subr.mxu0 0.0
  %178 = vmatpush2.msra.mxu0 0.0
  %179 = vmatprep.subr.mxu0 0.0
  %180 = vmatpush2.msra.mxu0 0.0
  %181 = vmatprep.mubr.f32.mxu0 0.0
  %182 = vmatmul.mubr.f32.gmra.mxu0 %v100
  %v183 = vpop.f32.mrf.mxu0
  %v184 = vadd.f32 0.0, %v183
  %v185 = vpop.f32.mrf.mxu0
  %v186 = vadd.f32 0.0, %v185
  %187 = vmatprep.mubr.f32.mxu0 0.0
  %188 = vmatmul.mubr.f32.gmra.mxu0 %v103
  %v189 = vpop.f32.mrf.mxu0
  %v190 = vadd.f32 0.0, %v189
  %v191 = vpop.f32.mrf.mxu0
  %v192 = vadd.f32 0.0, %v191
  %193 = vmatprep.mubr.f32.mxu0 0.0
  %194 = vmatmul.mubr.f32.gmra.mxu0 %v106
  %v195 = vpop.f32.mrf.mxu0
  %v196 = vadd.f32 0.0, %v195
  %v197 = vpop.f32.mrf.mxu0
  %v198 = vadd.f32 0.0, %v197
  %199 = vmatprep.mubr.f32.mxu0 0.0
  %200 = vmatmul.mubr.f32.gmra.mxu0 %v109
  %v201 = vpop.f32.mrf.mxu0
  %v202 = vadd.f32 0.0, %v201
  %v203 = vpop.f32.mrf.mxu0
  %v204 = vadd.f32 0.0, %v203
  %205 = vmatprep.mubr.f32.mxu0 0.0
  %206 = vmatmul.mubr.f32.gmra.mxu0 %v112
  %v207 = vpop.f32.mrf.mxu0
  %v208 = vadd.f32 0.0, %v207
  %v209 = vpop.f32.mrf.mxu0
  %v210 = vadd.f32 0.0, %v209
  %211 = vmatprep.mubr.f32.mxu0 0.0
  %212 = vmatmul.mubr.f32.gmra.mxu0 %v115
  %v213 = vpop.f32.mrf.mxu0
  %v214 = vadd.f32 0.0, %v213
  %v215 = vpop.f32.mrf.mxu0
  %v216 = vadd.f32 0.0, %v215
  %217 = vdwg.mxu0
  %218 = vmatprep.subr.mxu0 0.0
  %219 = vmatpush1.msra.mxu0 0.0
  %220 = vmatprep.subr.mxu0 0.0
  %221 = vmatpush1.msra.mxu0 0.0
  %222 = vmatprep.subr.mxu0 0.0
  %223 = vmatpush1.msra.mxu0 0.0
  %224 = vmatprep.subr.mxu0 0.0
  %225 = vmatpush1.msra.mxu0 0.0
  %226 = vmatprep.subr.mxu0 0.0
  %227 = vmatpush1.msra.mxu0 0.0
  %228 = vmatprep.subr.mxu0 0.0
  %229 = vmatpush1.msra.mxu0 0.0
  %230 = vmatprep.subr.mxu0 0.0
  %231 = vmatpush1.msra.mxu0 0.0
  %232 = vmatprep.subr.mxu0 0.0
  %233 = vmatpush1.msra.mxu0 0.0
  %234 = vmatprep.subr.mxu0 0.0
  %235 = vmatpush1.msra.mxu0 0.0
  %236 = vmatprep.subr.mxu0 0.0
  %237 = vmatpush1.msra.mxu0 0.0
  %238 = vmatprep.subr.mxu0 0.0
  %239 = vmatpush1.msra.mxu0 0.0
  %240 = vmatprep.subr.mxu0 0.0
  %241 = vmatpush1.msra.mxu0 0.0
  %242 = vmatprep.subr.mxu0 0.0
  %243 = vmatpush1.msra.mxu0 0.0
  %244 = vmatprep.subr.mxu0 0.0
  %245 = vmatpush1.msra.mxu0 0.0
  %246 = vmatprep.subr.mxu0 0.0
  %247 = vmatpush1.msra.mxu0 0.0
  %248 = vmatprep.subr.mxu0 0.0
  %249 = vmatpush1.msra.mxu0 %v22
  %250 = vmatprep.subr.mxu0 0.0
  %251 = vmatpush2.msra.mxu0 0.0
  %252 = vmatprep.subr.mxu0 0.0
  %253 = vmatpush2.msra.mxu0 0.0
  %254 = vmatprep.subr.mxu0 0.0
  %255 = vmatpush2.msra.mxu0 0.0
  %256 = vmatprep.subr.mxu0 0.0
  %257 = vmatpush2.msra.mxu0 0.0
  %258 = vmatprep.subr.mxu0 0.0
  %259 = vmatpush2.msra.mxu0 0.0
  %260 = vmatprep.subr.mxu0 0.0
  %261 = vmatpush2.msra.mxu0 0.0
  %262 = vmatprep.subr.mxu0 0.0
  %263 = vmatpush2.msra.mxu0 0.0
  %264 = vmatprep.subr.mxu0 0.0
  %265 = vmatpush2.msra.mxu0 0.0
  %266 = vmatprep.subr.mxu0 0.0
  %267 = vmatpush2.msra.mxu0 0.0
  %268 = vmatprep.subr.mxu0 0.0
  %269 = vmatpush2.msra.mxu0 0.0
  %270 = vmatprep.subr.mxu0 0.0
  %271 = vmatpush2.msra.mxu0 0.0
  %272 = vmatprep.subr.mxu0 0.0
  %273 = vmatpush2.msra.mxu0 0.0
  %274 = vmatprep.subr.mxu0 0.0
  %275 = vmatpush2.msra.mxu0 0.0
  %276 = vmatprep.subr.mxu0 0.0
  %277 = vmatpush2.msra.mxu0 0.0
  %278 = vmatprep.subr.mxu0 0.0
  %279 = vmatpush2.msra.mxu0 0.0
  %280 = vmatprep.subr.mxu0 0.0
  %281 = vmatpush2.msra.mxu0 0.0
  %282 = vmatprep.mubr.f32.mxu0 0.0
  %283 = vmatmul.mubr.f32.gmra.mxu0 %v100
  %v284 = vpop.f32.mrf.mxu0
  %v285 = vadd.f32 0.0, %v284
  %v286 = vpop.f32.mrf.mxu0
  %287 = vmatprep.mubr.f32.mxu0 0.0
  %288 = vmatmul.mubr.f32.gmra.mxu0 %v103
  %v289 = vpop.f32.mrf.mxu0
  %v290 = vadd.f32 0.0, %v289
  %v291 = vpop.f32.mrf.mxu0
  %292 = vmatprep.mubr.f32.mxu0 0.0
  %293 = vmatmul.mubr.f32.gmra.mxu0 %v106
  %v294 = vpop.f32.mrf.mxu0
  %v295 = vadd.f32 0.0, %v294
  %v296 = vpop.f32.mrf.mxu0
  %297 = vmatprep.mubr.f32.mxu0 0.0
  %298 = vmatmul.mubr.f32.gmra.mxu0 %v109
  %v299 = vpop.f32.mrf.mxu0
  %v300 = vadd.f32 0.0, %v299
  %v301 = vpop.f32.mrf.mxu0
  %302 = vmatprep.mubr.f32.mxu0 0.0
  %303 = vmatmul.mubr.f32.gmra.mxu0 %v112
  %v304 = vpop.f32.mrf.mxu0
  %v305 = vadd.f32 0.0, %v304
  %v306 = vpop.f32.mrf.mxu0
  %307 = vmatprep.mubr.f32.mxu0 0.0
  %308 = vmatmul.mubr.f32.gmra.mxu0 %v115
  %v309 = vpop.f32.mrf.mxu0
  %v310 = vadd.f32 0.0, %v309
  %v311 = vpop.f32.mrf.mxu0
  %312 = vdwg.mxu0
  %v313 = vadd.f32 %v184, %v186
  %v314 = vadd.f32 %v313, %v285
  %315 = vadd.xlane.f32.xlu0 %v314
  %v316 = vpop.xlane.xlu0 %315
  %v317 = vadd.f32 %v190, %v192
  %v318 = vadd.f32 %v317, %v290
  %319 = vadd.xlane.f32.xlu0 %v318
  %v320 = vpop.xlane.xlu0 %319
  %v321 = vadd.f32 %v196, %v198
  %v322 = vadd.f32 %v321, %v295
  %323 = vadd.xlane.f32.xlu0 %v322
  %v324 = vpop.xlane.xlu0 %323
  %v325 = vadd.f32 %v202, %v204
  %v326 = vadd.f32 %v325, %v300
  %327 = vadd.xlane.f32.xlu0 %v326
  %v328 = vpop.xlane.xlu0 %327
  %v329 = vadd.f32 %v208, %v210
  %v330 = vadd.f32 %v329, %v305
  %331 = vadd.xlane.f32.xlu0 %v330
  %v332 = vpop.xlane.xlu0 %331
  %v333 = vadd.f32 %v214, %v216
  %v334 = vadd.f32 %v333, %v310
  %335 = vadd.xlane.f32.xlu0 %v334
  %v336 = vpop.xlane.xlu0 %335
  %v337 = vmul.f32 %v316, 0.0030864198
  %v338 = vmul.f32 %v320, 0.0030864198
  %v339 = vmul.f32 %v324, 0.0030864198
  %v340 = vmul.f32 %v328, 0.0030864198
  %v341 = vmul.f32 %v332, 0.0030864198
  %v342 = vmul.f32 %v336, 0.0030864198
  %v343 = vmul.f32 %v184, %v184
  %v344 = vmul.f32 %v186, %v186
  %v345 = vmul.f32 %v285, %v285
  %v346 = vmul.f32 %v190, %v190
  %v347 = vmul.f32 %v192, %v192
  %v348 = vmul.f32 %v290, %v290
  %v349 = vmul.f32 %v196, %v196
  %v350 = vmul.f32 %v198, %v198
  %v351 = vmul.f32 %v295, %v295
  %v352 = vmul.f32 %v202, %v202
  %v353 = vmul.f32 %v204, %v204
  %v354 = vmul.f32 %v300, %v300
  %v355 = vmul.f32 %v208, %v208
  %v356 = vmul.f32 %v210, %v210
  %v357 = vmul.f32 %v305, %v305
  %v358 = vmul.f32 %v214, %v214
  %v359 = vmul.f32 %v216, %v216
  %v360 = vmul.f32 %v310, %v310
  %v361 = vadd.f32 %v343, %v344
  %v362 = vadd.f32 %v361, %v345
  %363 = vadd.xlane.f32.xlu0 %v362
  %v364 = vpop.xlane.xlu0 %363
  %v365 = vadd.f32 %v346, %v347
  %v366 = vadd.f32 %v365, %v348
  %367 = vadd.xlane.f32.xlu0 %v366
  %v368 = vpop.xlane.xlu0 %367
  %v369 = vadd.f32 %v349, %v350
  %v370 = vadd.f32 %v369, %v351
  %371 = vadd.xlane.f32.xlu0 %v370
  %v372 = vpop.xlane.xlu0 %371
  %v373 = vadd.f32 %v352, %v353
  %v374 = vadd.f32 %v373, %v354
  %375 = vadd.xlane.f32.xlu0 %v374
  %v376 = vpop.xlane.xlu0 %375
  %v377 = vadd.f32 %v355, %v356
  %v378 = vadd.f32 %v377, %v357
  %379 = vadd.xlane.f32.xlu0 %v378
  %v380 = vpop.xlane.xlu0 %379
  %v381 = vadd.f32 %v358, %v359
  %v382 = vadd.f32 %v381, %v360
  %383 = vadd.xlane.f32.xlu0 %v382
  %v384 = vpop.xlane.xlu0 %383
  %v385 = vmul.f32 %v364, 0.0030864198
  %v386 = vmul.f32 %v368, 0.0030864198
  %v387 = vmul.f32 %v372, 0.0030864198
  %v388 = vmul.f32 %v376, 0.0030864198
  %v389 = vmul.f32 %v380, 0.0030864198
  %v390 = vmul.f32 %v384, 0.0030864198
  %v391 = vmul.f32 %v337, %v337
  %v392 = vmul.f32 %v338, %v338
  %v393 = vmul.f32 %v339, %v339
  %v394 = vmul.f32 %v340, %v340
  %v395 = vmul.f32 %v341, %v341
  %v396 = vmul.f32 %v342, %v342
  %v397 = vsub.f32 %v385, %v391
  %v398 = vsub.f32 %v386, %v392
  %v399 = vsub.f32 %v387, %v393
  %v400 = vsub.f32 %v388, %v394
  %v401 = vsub.f32 %v389, %v395
  %v402 = vsub.f32 %v390, %v396
  %v403 = vsub.f32 %v184, %v337
  %v404 = vsub.f32 %v186, %v337
  %v405 = vsub.f32 %v285, %v337
  %v406 = vsub.f32 %v190, %v338
  %v407 = vsub.f32 %v192, %v338
  %v408 = vsub.f32 %v290, %v338
  %v409 = vsub.f32 %v196, %v339
  %v410 = vsub.f32 %v198, %v339
  %v411 = vsub.f32 %v295, %v339
  %v412 = vsub.f32 %v202, %v340
  %v413 = vsub.f32 %v204, %v340
  %v414 = vsub.f32 %v300, %v340
  %v415 = vsub.f32 %v208, %v341
  %v416 = vsub.f32 %v210, %v341
  %v417 = vsub.f32 %v305, %v341
  %v418 = vsub.f32 %v214, %v342
  %v419 = vsub.f32 %v216, %v342
  %v420 = vsub.f32 %v310, %v342
  %v421 = vadd.f32 %v397, 1e-05
  %v422 = vadd.f32 %v398, 1e-05
  %v423 = vadd.f32 %v399, 1e-05
  %v424 = vadd.f32 %v400, 1e-05
  %v425 = vadd.f32 %v401, 1e-05
  %v426 = vadd.f32 %v402, 1e-05
  %v427 = vrsqrt.pop %v421
  %v428 = vrsqrt.pop %v422
  %v429 = vrsqrt.pop %v423
  %v430 = vrsqrt.pop %v424
  %v431 = vrsqrt.pop %v425
  %v432 = vrsqrt.pop %v426
  %v433 = vmul.f32 %v427, %v30
  %v434 = vmul.f32 %v428, %v31
  %v435 = vmul.f32 %v429, %v32
  %v436 = vmul.f32 %v430, %v33
  %v437 = vmul.f32 %v431, %v34
  %v438 = vmul.f32 %v432, %v35
  %440 = vset.pattern.permute.xlu0 0
  %441 = vperm.xlu0 %440, %v433
  %v442 = vpop.permute.xlu0 %441
  %445 = vset.pattern.permute.xlu0 0
  %446 = vperm.xlu0 %445, %v434
  %v447 = vpop.permute.xlu0 %446
  %450 = vset.pattern.permute.xlu0 0
  %451 = vperm.xlu0 %450, %v435
  %v452 = vpop.permute.xlu0 %451
  %455 = vset.pattern.permute.xlu0 0
  %456 = vperm.xlu0 %455, %v436
  %v457 = vpop.permute.xlu0 %456
  %460 = vset.pattern.permute.xlu0 0
  %461 = vperm.xlu0 %460, %v437
  %v462 = vpop.permute.xlu0 %461
  %465 = vset.pattern.permute.xlu0 0
  %466 = vperm.xlu0 %465, %v438
  %v467 = vpop.permute.xlu0 %466
  %v469 = vmul.f32 %v403, %v442
  %v470 = vmul.f32 %v404, %v442
  %v471 = vmul.f32 %v405, %v442
  %v472 = vmul.f32 %v406, %v447
  %v473 = vmul.f32 %v407, %v447
  %v474 = vmul.f32 %v408, %v447
  %v475 = vmul.f32 %v409, %v452
  %v476 = vmul.f32 %v410, %v452
  %v477 = vmul.f32 %v411, %v452
  %v478 = vmul.f32 %v412, %v457
  %v479 = vmul.f32 %v413, %v457
  %v480 = vmul.f32 %v414, %v457
  %v481 = vmul.f32 %v415, %v462
  %v482 = vmul.f32 %v416, %v462
  %v483 = vmul.f32 %v417, %v462
  %v484 = vmul.f32 %v418, %v467
  %v485 = vmul.f32 %v419, %v467
  %v486 = vmul.f32 %v420, %v467
  %488 = vset.pattern.permute.xlu0 1
  %489 = vperm.xlu0 %488, %v30
  %v490 = vpop.permute.xlu0 %489
  %493 = vset.pattern.permute.xlu0 1
  %494 = vperm.xlu0 %493, %v31
  %v495 = vpop.permute.xlu0 %494
  %498 = vset.pattern.permute.xlu0 1
  %499 = vperm.xlu0 %498, %v32
  %v500 = vpop.permute.xlu0 %499
  %503 = vset.pattern.permute.xlu0 1
  %504 = vperm.xlu0 %503, %v33
  %v505 = vpop.permute.xlu0 %504
  %508 = vset.pattern.permute.xlu0 1
  %509 = vperm.xlu0 %508, %v34
  %v510 = vpop.permute.xlu0 %509
  %513 = vset.pattern.permute.xlu0 1
  %514 = vperm.xlu0 %513, %v35
  %v515 = vpop.permute.xlu0 %514
  %v517 = vadd.f32 %v469, %v490
  %v518 = vadd.f32 %v470, %v490
  %v519 = vadd.f32 %v471, %v490
  %v520 = vadd.f32 %v472, %v495
  %v521 = vadd.f32 %v473, %v495
  %v522 = vadd.f32 %v474, %v495
  %v523 = vadd.f32 %v475, %v500
  %v524 = vadd.f32 %v476, %v500
  %v525 = vadd.f32 %v477, %v500
  %v526 = vadd.f32 %v478, %v505
  %v527 = vadd.f32 %v479, %v505
  %v528 = vadd.f32 %v480, %v505
  %v529 = vadd.f32 %v481, %v510
  %v530 = vadd.f32 %v482, %v510
  %v531 = vadd.f32 %v483, %v510
  %v532 = vadd.f32 %v484, %v515
  %v533 = vadd.f32 %v485, %v515
  %v534 = vadd.f32 %v486, %v515
  %535 = vset.pattern.permute.xlu0 4
  %536 = vperm.xlu0 %535, %v30
  %v537 = vpop.permute.xlu0 %536
  %539 = vset.pattern.permute.xlu0 4
  %540 = vperm.xlu0 %539, %v31
  %v541 = vpop.permute.xlu0 %540
  %543 = vset.pattern.permute.xlu0 4
  %544 = vperm.xlu0 %543, %v32
  %v545 = vpop.permute.xlu0 %544
  %547 = vset.pattern.permute.xlu0 4
  %548 = vperm.xlu0 %547, %v33
  %v549 = vpop.permute.xlu0 %548
  %551 = vset.pattern.permute.xlu0 4
  %552 = vperm.xlu0 %551, %v34
  %v553 = vpop.permute.xlu0 %552
  %555 = vset.pattern.permute.xlu0 4
  %556 = vperm.xlu0 %555, %v35
  %v557 = vpop.permute.xlu0 %556
  %v559 = vmul.f32 %v517, %v537
  %v560 = vmul.f32 %v518, %v537
  %v561 = vmul.f32 %v519, %v537
  %v562 = vmul.f32 %v520, %v541
  %v563 = vmul.f32 %v521, %v541
  %v564 = vmul.f32 %v522, %v541
  %v565 = vmul.f32 %v523, %v545
  %v566 = vmul.f32 %v524, %v545
  %v567 = vmul.f32 %v525, %v545
  %v568 = vmul.f32 %v526, %v549
  %v569 = vmul.f32 %v527, %v549
  %v570 = vmul.f32 %v528, %v549
  %v571 = vmul.f32 %v529, %v553
  %v572 = vmul.f32 %v530, %v553
  %v573 = vmul.f32 %v531, %v553
  %v574 = vmul.f32 %v532, %v557
  %v575 = vmul.f32 %v533, %v557
  %v576 = vmul.f32 %v534, %v557
  %v577 = vadd.f32 %v559, 0.0
  %v578 = vadd.f32 %v560, 0.0
  %v579 = vadd.f32 %v561, 0.0
  %v580 = vadd.f32 %v562, 0.0
  %v581 = vadd.f32 %v563, 0.0
  %v582 = vadd.f32 %v564, 0.0
  %v583 = vadd.f32 %v565, 0.0
  %v584 = vadd.f32 %v566, 0.0
  %v585 = vadd.f32 %v567, 0.0
  %v586 = vadd.f32 %v568, 0.0
  %v587 = vadd.f32 %v569, 0.0
  %v588 = vadd.f32 %v570, 0.0
  %v589 = vadd.f32 %v571, 0.0
  %v590 = vadd.f32 %v572, 0.0
  %v591 = vadd.f32 %v573, 0.0
  %v592 = vadd.f32 %v574, 0.0
  %v593 = vadd.f32 %v575, 0.0
  %v594 = vadd.f32 %v576, 0.0
  %595 = vset.pattern.permute.xlu0 5
  %596 = vperm.xlu0 %595, %v30
  %v597 = vpop.permute.xlu0 %596
  %599 = vset.pattern.permute.xlu0 5
  %600 = vperm.xlu0 %599, %v31
  %v601 = vpop.permute.xlu0 %600
  %603 = vset.pattern.permute.xlu0 5
  %604 = vperm.xlu0 %603, %v32
  %v605 = vpop.permute.xlu0 %604
  %607 = vset.pattern.permute.xlu0 5
  %608 = vperm.xlu0 %607, %v33
  %v609 = vpop.permute.xlu0 %608
  %611 = vset.pattern.permute.xlu0 5
  %612 = vperm.xlu0 %611, %v34
  %v613 = vpop.permute.xlu0 %612
  %615 = vset.pattern.permute.xlu0 5
  %616 = vperm.xlu0 %615, %v35
  %v617 = vpop.permute.xlu0 %616
  %v619 = vmul.f32 %v517, %v597
  %v620 = vmul.f32 %v518, %v597
  %v621 = vmul.f32 %v519, %v597
  %v622 = vmul.f32 %v520, %v601
  %v623 = vmul.f32 %v521, %v601
  %v624 = vmul.f32 %v522, %v601
  %v625 = vmul.f32 %v523, %v605
  %v626 = vmul.f32 %v524, %v605
  %v627 = vmul.f32 %v525, %v605
  %v628 = vmul.f32 %v526, %v609
  %v629 = vmul.f32 %v527, %v609
  %v630 = vmul.f32 %v528, %v609
  %v631 = vmul.f32 %v529, %v613
  %v632 = vmul.f32 %v530, %v613
  %v633 = vmul.f32 %v531, %v613
  %v634 = vmul.f32 %v532, %v617
  %v635 = vmul.f32 %v533, %v617
  %v636 = vmul.f32 %v534, %v617
  %655 = vrot.lane.b32.xlu0 %v619, 127
  %v656 = vpop.permute.xlu0 %655
  %657 = vrot.lane.b32.xlu0 %v620, 127
  %v658 = vpop.permute.xlu0 %657
  %659 = vrot.lane.b32.xlu0 %v621, 127
  %v660 = vpop.permute.xlu0 %659
  %661 = vrot.lane.b32.xlu0 %v622, 127
  %v662 = vpop.permute.xlu0 %661
  %663 = vrot.lane.b32.xlu0 %v623, 127
  %v664 = vpop.permute.xlu0 %663
  %665 = vrot.lane.b32.xlu0 %v624, 127
  %v666 = vpop.permute.xlu0 %665
  %667 = vrot.lane.b32.xlu0 %v625, 127
  %v668 = vpop.permute.xlu0 %667
  %669 = vrot.lane.b32.xlu0 %v626, 127
  %v670 = vpop.permute.xlu0 %669
  %671 = vrot.lane.b32.xlu0 %v627, 127
  %v672 = vpop.permute.xlu0 %671
  %673 = vrot.lane.b32.xlu0 %v628, 127
  %v674 = vpop.permute.xlu0 %673
  %675 = vrot.lane.b32.xlu0 %v629, 127
  %v676 = vpop.permute.xlu0 %675
  %677 = vrot.lane.b32.xlu0 %v630, 127
  %v678 = vpop.permute.xlu0 %677
  %679 = vrot.lane.b32.xlu0 %v631, 127
  %v680 = vpop.permute.xlu0 %679
  %681 = vrot.lane.b32.xlu0 %v632, 127
  %v682 = vpop.permute.xlu0 %681
  %683 = vrot.lane.b32.xlu0 %v633, 127
  %v684 = vpop.permute.xlu0 %683
  %685 = vrot.lane.b32.xlu0 %v634, 127
  %v686 = vpop.permute.xlu0 %685
  %687 = vrot.lane.b32.xlu0 %v635, 127
  %v688 = vpop.permute.xlu0 %687
  %689 = vrot.lane.b32.xlu0 %v636, 127
  %v690 = vpop.permute.xlu0 %689
  %vm691 = vcmask 1039360
  %v692 = vsel %vm691, %v656, %v658
  %v693 = vsel %vm691, %v658, %v660
  %v694 = vsel %vm691, %v662, %v664
  %v695 = vsel %vm691, %v664, %v666
  %v696 = vsel %vm691, %v668, %v670
  %v697 = vsel %vm691, %v670, %v672
  %v698 = vsel %vm691, %v674, %v676
  %v699 = vsel %vm691, %v676, %v678
  %v700 = vsel %vm691, %v680, %v682
  %v701 = vsel %vm691, %v682, %v684
  %v702 = vsel %vm691, %v686, %v688
  %v703 = vsel %vm691, %v688, %v690
  %v722 = vadd.f32 %v577, %v692
  %v723 = vadd.f32 %v578, %v693
  %v724 = vadd.f32 %v579, %v660
  %v725 = vadd.f32 %v580, %v694
  %v726 = vadd.f32 %v581, %v695
  %v727 = vadd.f32 %v582, %v666
  %v728 = vadd.f32 %v583, %v696
  %v729 = vadd.f32 %v584, %v697
  %v730 = vadd.f32 %v585, %v672
  %v731 = vadd.f32 %v586, %v698
  %v732 = vadd.f32 %v587, %v699
  %v733 = vadd.f32 %v588, %v678
  %v734 = vadd.f32 %v589, %v700
  %v735 = vadd.f32 %v590, %v701
  %v736 = vadd.f32 %v591, %v684
  %v737 = vadd.f32 %v592, %v702
  %v738 = vadd.f32 %v593, %v703
  %v739 = vadd.f32 %v594, %v690
  %740 = vset.pattern.permute.xlu0 6
  %741 = vperm.xlu0 %740, %v30
  %v742 = vpop.permute.xlu0 %741
  %744 = vset.pattern.permute.xlu0 6
  %745 = vperm.xlu0 %744, %v31
  %v746 = vpop.permute.xlu0 %745
  %748 = vset.pattern.permute.xlu0 6
  %749 = vperm.xlu0 %748, %v32
  %v750 = vpop.permute.xlu0 %749
  %752 = vset.pattern.permute.xlu0 6
  %753 = vperm.xlu0 %752, %v33
  %v754 = vpop.permute.xlu0 %753
  %756 = vset.pattern.permute.xlu0 6
  %757 = vperm.xlu0 %756, %v34
  %v758 = vpop.permute.xlu0 %757
  %760 = vset.pattern.permute.xlu0 6
  %761 = vperm.xlu0 %760, %v35
  %v762 = vpop.permute.xlu0 %761
  %v764 = vmul.f32 %v517, %v742
  %v765 = vmul.f32 %v518, %v742
  %v766 = vmul.f32 %v519, %v742
  %v767 = vmul.f32 %v520, %v746
  %v768 = vmul.f32 %v521, %v746
  %v769 = vmul.f32 %v522, %v746
  %v770 = vmul.f32 %v523, %v750
  %v771 = vmul.f32 %v524, %v750
  %v772 = vmul.f32 %v525, %v750
  %v773 = vmul.f32 %v526, %v754
  %v774 = vmul.f32 %v527, %v754
  %v775 = vmul.f32 %v528, %v754
  %v776 = vmul.f32 %v529, %v758
  %v777 = vmul.f32 %v530, %v758
  %v778 = vmul.f32 %v531, %v758
  %v779 = vmul.f32 %v532, %v762
  %v780 = vmul.f32 %v533, %v762
  %v781 = vmul.f32 %v534, %v762
  %800 = vrot.lane.b32.xlu0 %v764, 126
  %v801 = vpop.permute.xlu0 %800
  %802 = vrot.lane.b32.xlu0 %v765, 126
  %v803 = vpop.permute.xlu0 %802
  %804 = vrot.lane.b32.xlu0 %v766, 126
  %v805 = vpop.permute.xlu0 %804
  %806 = vrot.lane.b32.xlu0 %v767, 126
  %v807 = vpop.permute.xlu0 %806
  %808 = vrot.lane.b32.xlu0 %v768, 126
  %v809 = vpop.permute.xlu0 %808
  %810 = vrot.lane.b32.xlu0 %v769, 126
  %v811 = vpop.permute.xlu0 %810
  %812 = vrot.lane.b32.xlu0 %v770, 126
  %v813 = vpop.permute.xlu0 %812
  %814 = vrot.lane.b32.xlu0 %v771, 126
  %v815 = vpop.permute.xlu0 %814
  %816 = vrot.lane.b32.xlu0 %v772, 126
  %v817 = vpop.permute.xlu0 %816
  %818 = vrot.lane.b32.xlu0 %v773, 126
  %v819 = vpop.permute.xlu0 %818
  %820 = vrot.lane.b32.xlu0 %v774, 126
  %v821 = vpop.permute.xlu0 %820
  %822 = vrot.lane.b32.xlu0 %v775, 126
  %v823 = vpop.permute.xlu0 %822
  %824 = vrot.lane.b32.xlu0 %v776, 126
  %v825 = vpop.permute.xlu0 %824
  %826 = vrot.lane.b32.xlu0 %v777, 126
  %v827 = vpop.permute.xlu0 %826
  %828 = vrot.lane.b32.xlu0 %v778, 126
  %v829 = vpop.permute.xlu0 %828
  %830 = vrot.lane.b32.xlu0 %v779, 126
  %v831 = vpop.permute.xlu0 %830
  %832 = vrot.lane.b32.xlu0 %v780, 126
  %v833 = vpop.permute.xlu0 %832
  %834 = vrot.lane.b32.xlu0 %v781, 126
  %v835 = vpop.permute.xlu0 %834
  %vm836 = vcmask 1031168
  %v837 = vsel %vm836, %v801, %v803
  %v838 = vsel %vm836, %v803, %v805
  %v839 = vsel %vm836, %v807, %v809
  %v840 = vsel %vm836, %v809, %v811
  %v841 = vsel %vm836, %v813, %v815
  %v842 = vsel %vm836, %v815, %v817
  %v843 = vsel %vm836, %v819, %v821
  %v844 = vsel %vm836, %v821, %v823
  %v845 = vsel %vm836, %v825, %v827
  %v846 = vsel %vm836, %v827, %v829
  %v847 = vsel %vm836, %v831, %v833
  %v848 = vsel %vm836, %v833, %v835
  %v867 = vadd.f32 %v722, %v837
  %v868 = vadd.f32 %v723, %v838
  %v869 = vadd.f32 %v724, %v805
  %v870 = vadd.f32 %v725, %v839
  %v871 = vadd.f32 %v726, %v840
  %v872 = vadd.f32 %v727, %v811
  %v873 = vadd.f32 %v728, %v841
  %v874 = vadd.f32 %v729, %v842
  %v875 = vadd.f32 %v730, %v817
  %v876 = vadd.f32 %v731, %v843
  %v877 = vadd.f32 %v732, %v844
  %v878 = vadd.f32 %v733, %v823
  %v879 = vadd.f32 %v734, %v845
  %v880 = vadd.f32 %v735, %v846
  %v881 = vadd.f32 %v736, %v829
  %v882 = vadd.f32 %v737, %v847
  %v883 = vadd.f32 %v738, %v848
  %v884 = vadd.f32 %v739, %v835
  %885 = vset.pattern.permute.xlu0 7
  %886 = vperm.xlu0 %885, %v30
  %v887 = vpop.permute.xlu0 %886
  %889 = vset.pattern.permute.xlu0 7
  %890 = vperm.xlu0 %889, %v31
  %v891 = vpop.permute.xlu0 %890
  %893 = vset.pattern.permute.xlu0 7
  %894 = vperm.xlu0 %893, %v32
  %v895 = vpop.permute.xlu0 %894
  %897 = vset.pattern.permute.xlu0 7
  %898 = vperm.xlu0 %897, %v33
  %v899 = vpop.permute.xlu0 %898
  %901 = vset.pattern.permute.xlu0 7
  %902 = vperm.xlu0 %901, %v34
  %v903 = vpop.permute.xlu0 %902
  %905 = vset.pattern.permute.xlu0 7
  %906 = vperm.xlu0 %905, %v35
  %v907 = vpop.permute.xlu0 %906
  %v909 = vmul.f32 %v517, %v887
  %v910 = vmul.f32 %v518, %v887
  %v911 = vmul.f32 %v519, %v887
  %v912 = vmul.f32 %v520, %v891
  %v913 = vmul.f32 %v521, %v891
  %v914 = vmul.f32 %v522, %v891
  %v915 = vmul.f32 %v523, %v895
  %v916 = vmul.f32 %v524, %v895
  %v917 = vmul.f32 %v525, %v895
  %v918 = vmul.f32 %v526, %v899
  %v919 = vmul.f32 %v527, %v899
  %v920 = vmul.f32 %v528, %v899
  %v921 = vmul.f32 %v529, %v903
  %v922 = vmul.f32 %v530, %v903
  %v923 = vmul.f32 %v531, %v903
  %v924 = vmul.f32 %v532, %v907
  %v925 = vmul.f32 %v533, %v907
  %v926 = vmul.f32 %v534, %v907
  %945 = vrot.lane.b32.xlu0 %v909, 110
  %v946 = vpop.permute.xlu0 %945
  %947 = vrot.lane.b32.xlu0 %v910, 110
  %v948 = vpop.permute.xlu0 %947
  %949 = vrot.lane.b32.xlu0 %v911, 110
  %v950 = vpop.permute.xlu0 %949
  %951 = vrot.lane.b32.xlu0 %v912, 110
  %v952 = vpop.permute.xlu0 %951
  %953 = vrot.lane.b32.xlu0 %v913, 110
  %v954 = vpop.permute.xlu0 %953
  %955 = vrot.lane.b32.xlu0 %v914, 110
  %v956 = vpop.permute.xlu0 %955
  %957 = vrot.lane.b32.xlu0 %v915, 110
  %v958 = vpop.permute.xlu0 %957
  %959 = vrot.lane.b32.xlu0 %v916, 110
  %v960 = vpop.permute.xlu0 %959
  %961 = vrot.lane.b32.xlu0 %v917, 110
  %v962 = vpop.permute.xlu0 %961
  %963 = vrot.lane.b32.xlu0 %v918, 110
  %v964 = vpop.permute.xlu0 %963
  %965 = vrot.lane.b32.xlu0 %v919, 110
  %v966 = vpop.permute.xlu0 %965
  %967 = vrot.lane.b32.xlu0 %v920, 110
  %v968 = vpop.permute.xlu0 %967
  %969 = vrot.lane.b32.xlu0 %v921, 110
  %v970 = vpop.permute.xlu0 %969
  %971 = vrot.lane.b32.xlu0 %v922, 110
  %v972 = vpop.permute.xlu0 %971
  %973 = vrot.lane.b32.xlu0 %v923, 110
  %v974 = vpop.permute.xlu0 %973
  %975 = vrot.lane.b32.xlu0 %v924, 110
  %v976 = vpop.permute.xlu0 %975
  %977 = vrot.lane.b32.xlu0 %v925, 110
  %v978 = vpop.permute.xlu0 %977
  %979 = vrot.lane.b32.xlu0 %v926, 110
  %v980 = vpop.permute.xlu0 %979
  %vm981 = vcmask 900096
  %v982 = vsel %vm981, %v946, %v948
  %v983 = vsel %vm981, %v948, %v950
  %v984 = vsel %vm981, %v952, %v954
  %v985 = vsel %vm981, %v954, %v956
  %v986 = vsel %vm981, %v958, %v960
  %v987 = vsel %vm981, %v960, %v962
  %v988 = vsel %vm981, %v964, %v966
  %v989 = vsel %vm981, %v966, %v968
  %v990 = vsel %vm981, %v970, %v972
  %v991 = vsel %vm981, %v972, %v974
  %v992 = vsel %vm981, %v976, %v978
  %v993 = vsel %vm981, %v978, %v980
  %v1012 = vadd.f32 %v867, %v982
  %v1013 = vadd.f32 %v868, %v983
  %v1014 = vadd.f32 %v869, %v950
  %v1015 = vadd.f32 %v870, %v984
  %v1016 = vadd.f32 %v871, %v985
  %v1017 = vadd.f32 %v872, %v956
  %v1018 = vadd.f32 %v873, %v986
  %v1019 = vadd.f32 %v874, %v987
  %v1020 = vadd.f32 %v875, %v962
  %v1021 = vadd.f32 %v876, %v988
  %v1022 = vadd.f32 %v877, %v989
  %v1023 = vadd.f32 %v878, %v968
  %v1024 = vadd.f32 %v879, %v990
  %v1025 = vadd.f32 %v880, %v991
  %v1026 = vadd.f32 %v881, %v974
  %v1027 = vadd.f32 %v882, %v992
  %v1028 = vadd.f32 %v883, %v993
  %v1029 = vadd.f32 %v884, %v980
  %1030 = vset.pattern.permute.xlu0 8
  %1031 = vperm.xlu0 %1030, %v30
  %v1032 = vpop.permute.xlu0 %1031
  %1034 = vset.pattern.permute.xlu0 8
  %1035 = vperm.xlu0 %1034, %v31
  %v1036 = vpop.permute.xlu0 %1035
  %1038 = vset.pattern.permute.xlu0 8
  %1039 = vperm.xlu0 %1038, %v32
  %v1040 = vpop.permute.xlu0 %1039
  %1042 = vset.pattern.permute.xlu0 8
  %1043 = vperm.xlu0 %1042, %v33
  %v1044 = vpop.permute.xlu0 %1043
  %1046 = vset.pattern.permute.xlu0 8
  %1047 = vperm.xlu0 %1046, %v34
  %v1048 = vpop.permute.xlu0 %1047
  %1050 = vset.pattern.permute.xlu0 8
  %1051 = vperm.xlu0 %1050, %v35
  %v1052 = vpop.permute.xlu0 %1051
  %v1054 = vmul.f32 %v517, %v1032
  %v1055 = vmul.f32 %v518, %v1032
  %v1056 = vmul.f32 %v519, %v1032
  %v1057 = vmul.f32 %v520, %v1036
  %v1058 = vmul.f32 %v521, %v1036
  %v1059 = vmul.f32 %v522, %v1036
  %v1060 = vmul.f32 %v523, %v1040
  %v1061 = vmul.f32 %v524, %v1040
  %v1062 = vmul.f32 %v525, %v1040
  %v1063 = vmul.f32 %v526, %v1044
  %v1064 = vmul.f32 %v527, %v1044
  %v1065 = vmul.f32 %v528, %v1044
  %v1066 = vmul.f32 %v529, %v1048
  %v1067 = vmul.f32 %v530, %v1048
  %v1068 = vmul.f32 %v531, %v1048
  %v1069 = vmul.f32 %v532, %v1052
  %v1070 = vmul.f32 %v533, %v1052
  %v1071 = vmul.f32 %v534, %v1052
  %1090 = vrot.lane.b32.xlu0 %v1054, 109
  %v1091 = vpop.permute.xlu0 %1090
  %1092 = vrot.lane.b32.xlu0 %v1055, 109
  %v1093 = vpop.permute.xlu0 %1092
  %1094 = vrot.lane.b32.xlu0 %v1056, 109
  %v1095 = vpop.permute.xlu0 %1094
  %1096 = vrot.lane.b32.xlu0 %v1057, 109
  %v1097 = vpop.permute.xlu0 %1096
  %1098 = vrot.lane.b32.xlu0 %v1058, 109
  %v1099 = vpop.permute.xlu0 %1098
  %1100 = vrot.lane.b32.xlu0 %v1059, 109
  %v1101 = vpop.permute.xlu0 %1100
  %1102 = vrot.lane.b32.xlu0 %v1060, 109
  %v1103 = vpop.permute.xlu0 %1102
  %1104 = vrot.lane.b32.xlu0 %v1061, 109
  %v1105 = vpop.permute.xlu0 %1104
  %1106 = vrot.lane.b32.xlu0 %v1062, 109
  %v1107 = vpop.permute.xlu0 %1106
  %1108 = vrot.lane.b32.xlu0 %v1063, 109
  %v1109 = vpop.permute.xlu0 %1108
  %1110 = vrot.lane.b32.xlu0 %v1064, 109
  %v1111 = vpop.permute.xlu0 %1110
  %1112 = vrot.lane.b32.xlu0 %v1065, 109
  %v1113 = vpop.permute.xlu0 %1112
  %1114 = vrot.lane.b32.xlu0 %v1066, 109
  %v1115 = vpop.permute.xlu0 %1114
  %1116 = vrot.lane.b32.xlu0 %v1067, 109
  %v1117 = vpop.permute.xlu0 %1116
  %1118 = vrot.lane.b32.xlu0 %v1068, 109
  %v1119 = vpop.permute.xlu0 %1118
  %1120 = vrot.lane.b32.xlu0 %v1069, 109
  %v1121 = vpop.permute.xlu0 %1120
  %1122 = vrot.lane.b32.xlu0 %v1070, 109
  %v1123 = vpop.permute.xlu0 %1122
  %1124 = vrot.lane.b32.xlu0 %v1071, 109
  %v1125 = vpop.permute.xlu0 %1124
  %vm1126 = vcmask 891904
  %v1127 = vsel %vm1126, %v1091, %v1093
  %v1128 = vsel %vm1126, %v1093, %v1095
  %v1129 = vsel %vm1126, %v1097, %v1099
  %v1130 = vsel %vm1126, %v1099, %v1101
  %v1131 = vsel %vm1126, %v1103, %v1105
  %v1132 = vsel %vm1126, %v1105, %v1107
  %v1133 = vsel %vm1126, %v1109, %v1111
  %v1134 = vsel %vm1126, %v1111, %v1113
  %v1135 = vsel %vm1126, %v1115, %v1117
  %v1136 = vsel %vm1126, %v1117, %v1119
  %v1137 = vsel %vm1126, %v1121, %v1123
  %v1138 = vsel %vm1126, %v1123, %v1125
  %v1157 = vadd.f32 %v1012, %v1127
  %v1158 = vadd.f32 %v1013, %v1128
  %v1159 = vadd.f32 %v1014, %v1095
  %v1160 = vadd.f32 %v1015, %v1129
  %v1161 = vadd.f32 %v1016, %v1130
  %v1162 = vadd.f32 %v1017, %v1101
  %v1163 = vadd.f32 %v1018, %v1131
  %v1164 = vadd.f32 %v1019, %v1132
  %v1165 = vadd.f32 %v1020, %v1107
  %v1166 = vadd.f32 %v1021, %v1133
  %v1167 = vadd.f32 %v1022, %v1134
  %v1168 = vadd.f32 %v1023, %v1113
  %v1169 = vadd.f32 %v1024, %v1135
  %v1170 = vadd.f32 %v1025, %v1136
  %v1171 = vadd.f32 %v1026, %v1119
  %v1172 = vadd.f32 %v1027, %v1137
  %v1173 = vadd.f32 %v1028, %v1138
  %v1174 = vadd.f32 %v1029, %v1125
  %1175 = vset.pattern.permute.xlu0 9
  %1176 = vperm.xlu0 %1175, %v30
  %v1177 = vpop.permute.xlu0 %1176
  %1179 = vset.pattern.permute.xlu0 9
  %1180 = vperm.xlu0 %1179, %v31
  %v1181 = vpop.permute.xlu0 %1180
  %1183 = vset.pattern.permute.xlu0 9
  %1184 = vperm.xlu0 %1183, %v32
  %v1185 = vpop.permute.xlu0 %1184
  %1187 = vset.pattern.permute.xlu0 9
  %1188 = vperm.xlu0 %1187, %v33
  %v1189 = vpop.permute.xlu0 %1188
  %1191 = vset.pattern.permute.xlu0 9
  %1192 = vperm.xlu0 %1191, %v34
  %v1193 = vpop.permute.xlu0 %1192
  %1195 = vset.pattern.permute.xlu0 9
  %1196 = vperm.xlu0 %1195, %v35
  %v1197 = vpop.permute.xlu0 %1196
  %v1199 = vmul.f32 %v517, %v1177
  %v1200 = vmul.f32 %v518, %v1177
  %v1201 = vmul.f32 %v519, %v1177
  %v1202 = vmul.f32 %v520, %v1181
  %v1203 = vmul.f32 %v521, %v1181
  %v1204 = vmul.f32 %v522, %v1181
  %v1205 = vmul.f32 %v523, %v1185
  %v1206 = vmul.f32 %v524, %v1185
  %v1207 = vmul.f32 %v525, %v1185
  %v1208 = vmul.f32 %v526, %v1189
  %v1209 = vmul.f32 %v527, %v1189
  %v1210 = vmul.f32 %v528, %v1189
  %v1211 = vmul.f32 %v529, %v1193
  %v1212 = vmul.f32 %v530, %v1193
  %v1213 = vmul.f32 %v531, %v1193
  %v1214 = vmul.f32 %v532, %v1197
  %v1215 = vmul.f32 %v533, %v1197
  %v1216 = vmul.f32 %v534, %v1197
  %1235 = vrot.lane.b32.xlu0 %v1199, 108
  %v1236 = vpop.permute.xlu0 %1235
  %1237 = vrot.lane.b32.xlu0 %v1200, 108
  %v1238 = vpop.permute.xlu0 %1237
  %1239 = vrot.lane.b32.xlu0 %v1201, 108
  %v1240 = vpop.permute.xlu0 %1239
  %1241 = vrot.lane.b32.xlu0 %v1202, 108
  %v1242 = vpop.permute.xlu0 %1241
  %1243 = vrot.lane.b32.xlu0 %v1203, 108
  %v1244 = vpop.permute.xlu0 %1243
  %1245 = vrot.lane.b32.xlu0 %v1204, 108
  %v1246 = vpop.permute.xlu0 %1245
  %1247 = vrot.lane.b32.xlu0 %v1205, 108
  %v1248 = vpop.permute.xlu0 %1247
  %1249 = vrot.lane.b32.xlu0 %v1206, 108
  %v1250 = vpop.permute.xlu0 %1249
  %1251 = vrot.lane.b32.xlu0 %v1207, 108
  %v1252 = vpop.permute.xlu0 %1251
  %1253 = vrot.lane.b32.xlu0 %v1208, 108
  %v1254 = vpop.permute.xlu0 %1253
  %1255 = vrot.lane.b32.xlu0 %v1209, 108
  %v1256 = vpop.permute.xlu0 %1255
  %1257 = vrot.lane.b32.xlu0 %v1210, 108
  %v1258 = vpop.permute.xlu0 %1257
  %1259 = vrot.lane.b32.xlu0 %v1211, 108
  %v1260 = vpop.permute.xlu0 %1259
  %1261 = vrot.lane.b32.xlu0 %v1212, 108
  %v1262 = vpop.permute.xlu0 %1261
  %1263 = vrot.lane.b32.xlu0 %v1213, 108
  %v1264 = vpop.permute.xlu0 %1263
  %1265 = vrot.lane.b32.xlu0 %v1214, 108
  %v1266 = vpop.permute.xlu0 %1265
  %1267 = vrot.lane.b32.xlu0 %v1215, 108
  %v1268 = vpop.permute.xlu0 %1267
  %1269 = vrot.lane.b32.xlu0 %v1216, 108
  %v1270 = vpop.permute.xlu0 %1269
  %vm1271 = vcmask 883712
  %v1272 = vsel %vm1271, %v1236, %v1238
  %v1273 = vsel %vm1271, %v1238, %v1240
  %v1274 = vsel %vm1271, %v1242, %v1244
  %v1275 = vsel %vm1271, %v1244, %v1246
  %v1276 = vsel %vm1271, %v1248, %v1250
  %v1277 = vsel %vm1271, %v1250, %v1252
  %v1278 = vsel %vm1271, %v1254, %v1256
  %v1279 = vsel %vm1271, %v1256, %v1258
  %v1280 = vsel %vm1271, %v1260, %v1262
  %v1281 = vsel %vm1271, %v1262, %v1264
  %v1282 = vsel %vm1271, %v1266, %v1268
  %v1283 = vsel %vm1271, %v1268, %v1270
  %v1302 = vadd.f32 %v1157, %v1272
  %v1303 = vadd.f32 %v1158, %v1273
  %v1304 = vadd.f32 %v1159, %v1240
  %v1305 = vadd.f32 %v1160, %v1274
  %v1306 = vadd.f32 %v1161, %v1275
  %v1307 = vadd.f32 %v1162, %v1246
  %v1308 = vadd.f32 %v1163, %v1276
  %v1309 = vadd.f32 %v1164, %v1277
  %v1310 = vadd.f32 %v1165, %v1252
  %v1311 = vadd.f32 %v1166, %v1278
  %v1312 = vadd.f32 %v1167, %v1279
  %v1313 = vadd.f32 %v1168, %v1258
  %v1314 = vadd.f32 %v1169, %v1280
  %v1315 = vadd.f32 %v1170, %v1281
  %v1316 = vadd.f32 %v1171, %v1264
  %v1317 = vadd.f32 %v1172, %v1282
  %v1318 = vadd.f32 %v1173, %v1283
  %v1319 = vadd.f32 %v1174, %v1270
  %1320 = vset.pattern.permute.xlu0 10
  %1321 = vperm.xlu0 %1320, %v30
  %v1322 = vpop.permute.xlu0 %1321
  %1324 = vset.pattern.permute.xlu0 10
  %1325 = vperm.xlu0 %1324, %v31
  %v1326 = vpop.permute.xlu0 %1325
  %1328 = vset.pattern.permute.xlu0 10
  %1329 = vperm.xlu0 %1328, %v32
  %v1330 = vpop.permute.xlu0 %1329
  %1332 = vset.pattern.permute.xlu0 10
  %1333 = vperm.xlu0 %1332, %v33
  %v1334 = vpop.permute.xlu0 %1333
  %1336 = vset.pattern.permute.xlu0 10
  %1337 = vperm.xlu0 %1336, %v34
  %v1338 = vpop.permute.xlu0 %1337
  %1340 = vset.pattern.permute.xlu0 10
  %1341 = vperm.xlu0 %1340, %v35
  %v1342 = vpop.permute.xlu0 %1341
  %v1344 = vmul.f32 %v517, %v1322
  %v1345 = vmul.f32 %v518, %v1322
  %v1346 = vmul.f32 %v519, %v1322
  %v1347 = vmul.f32 %v520, %v1326
  %v1348 = vmul.f32 %v521, %v1326
  %v1349 = vmul.f32 %v522, %v1326
  %v1350 = vmul.f32 %v523, %v1330
  %v1351 = vmul.f32 %v524, %v1330
  %v1352 = vmul.f32 %v525, %v1330
  %v1353 = vmul.f32 %v526, %v1334
  %v1354 = vmul.f32 %v527, %v1334
  %v1355 = vmul.f32 %v528, %v1334
  %v1356 = vmul.f32 %v529, %v1338
  %v1357 = vmul.f32 %v530, %v1338
  %v1358 = vmul.f32 %v531, %v1338
  %v1359 = vmul.f32 %v532, %v1342
  %v1360 = vmul.f32 %v533, %v1342
  %v1361 = vmul.f32 %v534, %v1342
  %1380 = vrot.lane.b32.xlu0 %v1344, 92
  %v1381 = vpop.permute.xlu0 %1380
  %1382 = vrot.lane.b32.xlu0 %v1345, 92
  %v1383 = vpop.permute.xlu0 %1382
  %1384 = vrot.lane.b32.xlu0 %v1346, 92
  %v1385 = vpop.permute.xlu0 %1384
  %1386 = vrot.lane.b32.xlu0 %v1347, 92
  %v1387 = vpop.permute.xlu0 %1386
  %1388 = vrot.lane.b32.xlu0 %v1348, 92
  %v1389 = vpop.permute.xlu0 %1388
  %1390 = vrot.lane.b32.xlu0 %v1349, 92
  %v1391 = vpop.permute.xlu0 %1390
  %1392 = vrot.lane.b32.xlu0 %v1350, 92
  %v1393 = vpop.permute.xlu0 %1392
  %1394 = vrot.lane.b32.xlu0 %v1351, 92
  %v1395 = vpop.permute.xlu0 %1394
  %1396 = vrot.lane.b32.xlu0 %v1352, 92
  %v1397 = vpop.permute.xlu0 %1396
  %1398 = vrot.lane.b32.xlu0 %v1353, 92
  %v1399 = vpop.permute.xlu0 %1398
  %1400 = vrot.lane.b32.xlu0 %v1354, 92
  %v1401 = vpop.permute.xlu0 %1400
  %1402 = vrot.lane.b32.xlu0 %v1355, 92
  %v1403 = vpop.permute.xlu0 %1402
  %1404 = vrot.lane.b32.xlu0 %v1356, 92
  %v1405 = vpop.permute.xlu0 %1404
  %1406 = vrot.lane.b32.xlu0 %v1357, 92
  %v1407 = vpop.permute.xlu0 %1406
  %1408 = vrot.lane.b32.xlu0 %v1358, 92
  %v1409 = vpop.permute.xlu0 %1408
  %1410 = vrot.lane.b32.xlu0 %v1359, 92
  %v1411 = vpop.permute.xlu0 %1410
  %1412 = vrot.lane.b32.xlu0 %v1360, 92
  %v1413 = vpop.permute.xlu0 %1412
  %1414 = vrot.lane.b32.xlu0 %v1361, 92
  %v1415 = vpop.permute.xlu0 %1414
  %vm1416 = vcmask 752640
  %v1417 = vsel %vm1416, %v1381, %v1383
  %v1418 = vsel %vm1416, %v1383, %v1385
  %v1419 = vsel %vm1416, %v1387, %v1389
  %v1420 = vsel %vm1416, %v1389, %v1391
  %v1421 = vsel %vm1416, %v1393, %v1395
  %v1422 = vsel %vm1416, %v1395, %v1397
  %v1423 = vsel %vm1416, %v1399, %v1401
  %v1424 = vsel %vm1416, %v1401, %v1403
  %v1425 = vsel %vm1416, %v1405, %v1407
  %v1426 = vsel %vm1416, %v1407, %v1409
  %v1427 = vsel %vm1416, %v1411, %v1413
  %v1428 = vsel %vm1416, %v1413, %v1415
  %v1447 = vadd.f32 %v1302, %v1417
  %v1448 = vadd.f32 %v1303, %v1418
  %v1449 = vadd.f32 %v1304, %v1385
  %v1450 = vadd.f32 %v1305, %v1419
  %v1451 = vadd.f32 %v1306, %v1420
  %v1452 = vadd.f32 %v1307, %v1391
  %v1453 = vadd.f32 %v1308, %v1421
  %v1454 = vadd.f32 %v1309, %v1422
  %v1455 = vadd.f32 %v1310, %v1397
  %v1456 = vadd.f32 %v1311, %v1423
  %v1457 = vadd.f32 %v1312, %v1424
  %v1458 = vadd.f32 %v1313, %v1403
  %v1459 = vadd.f32 %v1314, %v1425
  %v1460 = vadd.f32 %v1315, %v1426
  %v1461 = vadd.f32 %v1316, %v1409
  %v1462 = vadd.f32 %v1317, %v1427
  %v1463 = vadd.f32 %v1318, %v1428
  %v1464 = vadd.f32 %v1319, %v1415
  %1465 = vset.pattern.permute.xlu0 11
  %1466 = vperm.xlu0 %1465, %v30
  %v1467 = vpop.permute.xlu0 %1466
  %1469 = vset.pattern.permute.xlu0 11
  %1470 = vperm.xlu0 %1469, %v31
  %v1471 = vpop.permute.xlu0 %1470
  %1473 = vset.pattern.permute.xlu0 11
  %1474 = vperm.xlu0 %1473, %v32
  %v1475 = vpop.permute.xlu0 %1474
  %1477 = vset.pattern.permute.xlu0 11
  %1478 = vperm.xlu0 %1477, %v33
  %v1479 = vpop.permute.xlu0 %1478
  %1481 = vset.pattern.permute.xlu0 11
  %1482 = vperm.xlu0 %1481, %v34
  %v1483 = vpop.permute.xlu0 %1482
  %1485 = vset.pattern.permute.xlu0 11
  %1486 = vperm.xlu0 %1485, %v35
  %v1487 = vpop.permute.xlu0 %1486
  %v1489 = vmul.f32 %v517, %v1467
  %v1490 = vmul.f32 %v518, %v1467
  %v1491 = vmul.f32 %v519, %v1467
  %v1492 = vmul.f32 %v520, %v1471
  %v1493 = vmul.f32 %v521, %v1471
  %v1494 = vmul.f32 %v522, %v1471
  %v1495 = vmul.f32 %v523, %v1475
  %v1496 = vmul.f32 %v524, %v1475
  %v1497 = vmul.f32 %v525, %v1475
  %v1498 = vmul.f32 %v526, %v1479
  %v1499 = vmul.f32 %v527, %v1479
  %v1500 = vmul.f32 %v528, %v1479
  %v1501 = vmul.f32 %v529, %v1483
  %v1502 = vmul.f32 %v530, %v1483
  %v1503 = vmul.f32 %v531, %v1483
  %v1504 = vmul.f32 %v532, %v1487
  %v1505 = vmul.f32 %v533, %v1487
  %v1506 = vmul.f32 %v534, %v1487
  %1525 = vrot.lane.b32.xlu0 %v1489, 91
  %v1526 = vpop.permute.xlu0 %1525
  %1527 = vrot.lane.b32.xlu0 %v1490, 91
  %v1528 = vpop.permute.xlu0 %1527
  %1529 = vrot.lane.b32.xlu0 %v1491, 91
  %v1530 = vpop.permute.xlu0 %1529
  %1531 = vrot.lane.b32.xlu0 %v1492, 91
  %v1532 = vpop.permute.xlu0 %1531
  %1533 = vrot.lane.b32.xlu0 %v1493, 91
  %v1534 = vpop.permute.xlu0 %1533
  %1535 = vrot.lane.b32.xlu0 %v1494, 91
  %v1536 = vpop.permute.xlu0 %1535
  %1537 = vrot.lane.b32.xlu0 %v1495, 91
  %v1538 = vpop.permute.xlu0 %1537
  %1539 = vrot.lane.b32.xlu0 %v1496, 91
  %v1540 = vpop.permute.xlu0 %1539
  %1541 = vrot.lane.b32.xlu0 %v1497, 91
  %v1542 = vpop.permute.xlu0 %1541
  %1543 = vrot.lane.b32.xlu0 %v1498, 91
  %v1544 = vpop.permute.xlu0 %1543
  %1545 = vrot.lane.b32.xlu0 %v1499, 91
  %v1546 = vpop.permute.xlu0 %1545
  %1547 = vrot.lane.b32.xlu0 %v1500, 91
  %v1548 = vpop.permute.xlu0 %1547
  %1549 = vrot.lane.b32.xlu0 %v1501, 91
  %v1550 = vpop.permute.xlu0 %1549
  %1551 = vrot.lane.b32.xlu0 %v1502, 91
  %v1552 = vpop.permute.xlu0 %1551
  %1553 = vrot.lane.b32.xlu0 %v1503, 91
  %v1554 = vpop.permute.xlu0 %1553
  %1555 = vrot.lane.b32.xlu0 %v1504, 91
  %v1556 = vpop.permute.xlu0 %1555
  %1557 = vrot.lane.b32.xlu0 %v1505, 91
  %v1558 = vpop.permute.xlu0 %1557
  %1559 = vrot.lane.b32.xlu0 %v1506, 91
  %v1560 = vpop.permute.xlu0 %1559
  %vm1561 = vcmask 744448
  %v1562 = vsel %vm1561, %v1526, %v1528
  %v1563 = vsel %vm1561, %v1528, %v1530
  %v1564 = vsel %vm1561, %v1532, %v1534
  %v1565 = vsel %vm1561, %v1534, %v1536
  %v1566 = vsel %vm1561, %v1538, %v1540
  %v1567 = vsel %vm1561, %v1540, %v1542
  %v1568 = vsel %vm1561, %v1544, %v1546
  %v1569 = vsel %vm1561, %v1546, %v1548
  %v1570 = vsel %vm1561, %v1550, %v1552
  %v1571 = vsel %vm1561, %v1552, %v1554
  %v1572 = vsel %vm1561, %v1556, %v1558
  %v1573 = vsel %vm1561, %v1558, %v1560
  %v1592 = vadd.f32 %v1447, %v1562
  %v1593 = vadd.f32 %v1448, %v1563
  %v1594 = vadd.f32 %v1449, %v1530
  %v1595 = vadd.f32 %v1450, %v1564
  %v1596 = vadd.f32 %v1451, %v1565
  %v1597 = vadd.f32 %v1452, %v1536
  %v1598 = vadd.f32 %v1453, %v1566
  %v1599 = vadd.f32 %v1454, %v1567
  %v1600 = vadd.f32 %v1455, %v1542
  %v1601 = vadd.f32 %v1456, %v1568
  %v1602 = vadd.f32 %v1457, %v1569
  %v1603 = vadd.f32 %v1458, %v1548
  %v1604 = vadd.f32 %v1459, %v1570
  %v1605 = vadd.f32 %v1460, %v1571
  %v1606 = vadd.f32 %v1461, %v1554
  %v1607 = vadd.f32 %v1462, %v1572
  %v1608 = vadd.f32 %v1463, %v1573
  %v1609 = vadd.f32 %v1464, %v1560
  %1610 = vset.pattern.permute.xlu0 12
  %1611 = vperm.xlu0 %1610, %v30
  %v1612 = vpop.permute.xlu0 %1611
  %1614 = vset.pattern.permute.xlu0 12
  %1615 = vperm.xlu0 %1614, %v31
  %v1616 = vpop.permute.xlu0 %1615
  %1618 = vset.pattern.permute.xlu0 12
  %1619 = vperm.xlu0 %1618, %v32
  %v1620 = vpop.permute.xlu0 %1619
  %1622 = vset.pattern.permute.xlu0 12
  %1623 = vperm.xlu0 %1622, %v33
  %v1624 = vpop.permute.xlu0 %1623
  %1626 = vset.pattern.permute.xlu0 12
  %1627 = vperm.xlu0 %1626, %v34
  %v1628 = vpop.permute.xlu0 %1627
  %1630 = vset.pattern.permute.xlu0 12
  %1631 = vperm.xlu0 %1630, %v35
  %v1632 = vpop.permute.xlu0 %1631
  %v1634 = vmul.f32 %v517, %v1612
  %v1635 = vmul.f32 %v518, %v1612
  %v1636 = vmul.f32 %v519, %v1612
  %v1637 = vmul.f32 %v520, %v1616
  %v1638 = vmul.f32 %v521, %v1616
  %v1639 = vmul.f32 %v522, %v1616
  %v1640 = vmul.f32 %v523, %v1620
  %v1641 = vmul.f32 %v524, %v1620
  %v1642 = vmul.f32 %v525, %v1620
  %v1643 = vmul.f32 %v526, %v1624
  %v1644 = vmul.f32 %v527, %v1624
  %v1645 = vmul.f32 %v528, %v1624
  %v1646 = vmul.f32 %v529, %v1628
  %v1647 = vmul.f32 %v530, %v1628
  %v1648 = vmul.f32 %v531, %v1628
  %v1649 = vmul.f32 %v532, %v1632
  %v1650 = vmul.f32 %v533, %v1632
  %v1651 = vmul.f32 %v534, %v1632
  %1670 = vrot.lane.b32.xlu0 %v1634, 90
  %v1671 = vpop.permute.xlu0 %1670
  %1672 = vrot.lane.b32.xlu0 %v1635, 90
  %v1673 = vpop.permute.xlu0 %1672
  %1674 = vrot.lane.b32.xlu0 %v1636, 90
  %v1675 = vpop.permute.xlu0 %1674
  %1676 = vrot.lane.b32.xlu0 %v1637, 90
  %v1677 = vpop.permute.xlu0 %1676
  %1678 = vrot.lane.b32.xlu0 %v1638, 90
  %v1679 = vpop.permute.xlu0 %1678
  %1680 = vrot.lane.b32.xlu0 %v1639, 90
  %v1681 = vpop.permute.xlu0 %1680
  %1682 = vrot.lane.b32.xlu0 %v1640, 90
  %v1683 = vpop.permute.xlu0 %1682
  %1684 = vrot.lane.b32.xlu0 %v1641, 90
  %v1685 = vpop.permute.xlu0 %1684
  %1686 = vrot.lane.b32.xlu0 %v1642, 90
  %v1687 = vpop.permute.xlu0 %1686
  %1688 = vrot.lane.b32.xlu0 %v1643, 90
  %v1689 = vpop.permute.xlu0 %1688
  %1690 = vrot.lane.b32.xlu0 %v1644, 90
  %v1691 = vpop.permute.xlu0 %1690
  %1692 = vrot.lane.b32.xlu0 %v1645, 90
  %v1693 = vpop.permute.xlu0 %1692
  %1694 = vrot.lane.b32.xlu0 %v1646, 90
  %v1695 = vpop.permute.xlu0 %1694
  %1696 = vrot.lane.b32.xlu0 %v1647, 90
  %v1697 = vpop.permute.xlu0 %1696
  %1698 = vrot.lane.b32.xlu0 %v1648, 90
  %v1699 = vpop.permute.xlu0 %1698
  %1700 = vrot.lane.b32.xlu0 %v1649, 90
  %v1701 = vpop.permute.xlu0 %1700
  %1702 = vrot.lane.b32.xlu0 %v1650, 90
  %v1703 = vpop.permute.xlu0 %1702
  %1704 = vrot.lane.b32.xlu0 %v1651, 90
  %v1705 = vpop.permute.xlu0 %1704
  %vm1706 = vcmask 736256
  %v1707 = vsel %vm1706, %v1671, %v1673
  %v1708 = vsel %vm1706, %v1673, %v1675
  %v1709 = vsel %vm1706, %v1677, %v1679
  %v1710 = vsel %vm1706, %v1679, %v1681
  %v1711 = vsel %vm1706, %v1683, %v1685
  %v1712 = vsel %vm1706, %v1685, %v1687
  %v1713 = vsel %vm1706, %v1689, %v1691
  %v1714 = vsel %vm1706, %v1691, %v1693
  %v1715 = vsel %vm1706, %v1695, %v1697
  %v1716 = vsel %vm1706, %v1697, %v1699
  %v1717 = vsel %vm1706, %v1701, %v1703
  %v1718 = vsel %vm1706, %v1703, %v1705
  %v1737 = vadd.f32 %v1592, %v1707
  %v1738 = vadd.f32 %v1593, %v1708
  %v1739 = vadd.f32 %v1594, %v1675
  %v1740 = vadd.f32 %v1595, %v1709
  %v1741 = vadd.f32 %v1596, %v1710
  %v1742 = vadd.f32 %v1597, %v1681
  %v1743 = vadd.f32 %v1598, %v1711
  %v1744 = vadd.f32 %v1599, %v1712
  %v1745 = vadd.f32 %v1600, %v1687
  %v1746 = vadd.f32 %v1601, %v1713
  %v1747 = vadd.f32 %v1602, %v1714
  %v1748 = vadd.f32 %v1603, %v1693
  %v1749 = vadd.f32 %v1604, %v1715
  %v1750 = vadd.f32 %v1605, %v1716
  %v1751 = vadd.f32 %v1606, %v1699
  %v1752 = vadd.f32 %v1607, %v1717
  %v1753 = vadd.f32 %v1608, %v1718
  %v1754 = vadd.f32 %v1609, %v1705
  %v1755 = vmul.f32 %v1737, %v95
  %v1756 = vmul.f32 %v1738, %v96
  %v1757 = vmul.f32 %v1739, %v97
  %v1758 = vmul.f32 %v1740, %v95
  %v1759 = vmul.f32 %v1741, %v96
  %v1760 = vmul.f32 %v1742, %v97
  %v1761 = vmul.f32 %v1743, %v95
  %v1762 = vmul.f32 %v1744, %v96
  %v1763 = vmul.f32 %v1745, %v97
  %v1764 = vmul.f32 %v1746, %v95
  %v1765 = vmul.f32 %v1747, %v96
  %v1766 = vmul.f32 %v1748, %v97
  %v1767 = vmul.f32 %v1749, %v95
  %v1768 = vmul.f32 %v1750, %v96
  %v1769 = vmul.f32 %v1751, %v97
  %v1770 = vmul.f32 %v1752, %v95
  %v1771 = vmul.f32 %v1753, %v96
  %v1772 = vmul.f32 %v1754, %v97
  %v1773 = vadd.f32 %v1755, %v1756
  %vm1774 = vcmask 261120
  %v1775 = vsel %vm1774, %v1757, 0.0
  %v1776 = vadd.f32 %v1773, %v1775
  %1777 = vadd.xlane.f32.xlu0 %v1776
  %v1778 = vpop.xlane.xlu0 %1777
  %v1779 = vadd.f32 %v1758, %v1759
  %v1780 = vsel %vm1774, %v1760, 0.0
  %v1781 = vadd.f32 %v1779, %v1780
  %1782 = vadd.xlane.f32.xlu0 %v1781
  %v1783 = vpop.xlane.xlu0 %1782
  %v1784 = vadd.f32 %v1761, %v1762
  %v1785 = vsel %vm1774, %v1763, 0.0
  %v1786 = vadd.f32 %v1784, %v1785
  %1787 = vadd.xlane.f32.xlu0 %v1786
  %v1788 = vpop.xlane.xlu0 %1787
  %v1789 = vadd.f32 %v1764, %v1765
  %v1790 = vsel %vm1774, %v1766, 0.0
  %v1791 = vadd.f32 %v1789, %v1790
  %1792 = vadd.xlane.f32.xlu0 %v1791
  %v1793 = vpop.xlane.xlu0 %1792
  %v1794 = vadd.f32 %v1767, %v1768
  %v1795 = vsel %vm1774, %v1769, 0.0
  %v1796 = vadd.f32 %v1794, %v1795
  %1797 = vadd.xlane.f32.xlu0 %v1796
  %v1798 = vpop.xlane.xlu0 %1797
  %v1799 = vadd.f32 %v1770, %v1771
  %v1800 = vsel %vm1774, %v1772, 0.0
  %v1801 = vadd.f32 %v1799, %v1800
  %1802 = vadd.xlane.f32.xlu0 %v1801
  %v1803 = vpop.xlane.xlu0 %1802
  %v1804 = vmul.f32 %v1778, 0.00390625
  %v1805 = vmul.f32 %v1783, 0.00390625
  %v1806 = vmul.f32 %v1788, 0.00390625
  %v1807 = vmul.f32 %v1793, 0.00390625
  %v1808 = vmul.f32 %v1798, 0.00390625
  %v1809 = vmul.f32 %v1803, 0.00390625
  %v1810 = vmul.f32 %v1755, %v1737
  %v1811 = vmul.f32 %v1756, %v1738
  %v1812 = vmul.f32 %v1757, %v1739
  %v1813 = vmul.f32 %v1758, %v1740
  %v1814 = vmul.f32 %v1759, %v1741
  %v1815 = vmul.f32 %v1760, %v1742
  %v1816 = vmul.f32 %v1761, %v1743
  %v1817 = vmul.f32 %v1762, %v1744
  %v1818 = vmul.f32 %v1763, %v1745
  %v1819 = vmul.f32 %v1764, %v1746
  %v1820 = vmul.f32 %v1765, %v1747
  %v1821 = vmul.f32 %v1766, %v1748
  %v1822 = vmul.f32 %v1767, %v1749
  %v1823 = vmul.f32 %v1768, %v1750
  %v1824 = vmul.f32 %v1769, %v1751
  %v1825 = vmul.f32 %v1770, %v1752
  %v1826 = vmul.f32 %v1771, %v1753
  %v1827 = vmul.f32 %v1772, %v1754
  %v1828 = vadd.f32 %v1810, %v1811
  %v1829 = vsel %vm1774, %v1812, 0.0
  %v1830 = vadd.f32 %v1828, %v1829
  %1831 = vadd.xlane.f32.xlu0 %v1830
  %v1832 = vpop.xlane.xlu0 %1831
  %v1833 = vadd.f32 %v1813, %v1814
  %v1834 = vsel %vm1774, %v1815, 0.0
  %v1835 = vadd.f32 %v1833, %v1834
  %1836 = vadd.xlane.f32.xlu0 %v1835
  %v1837 = vpop.xlane.xlu0 %1836
  %v1838 = vadd.f32 %v1816, %v1817
  %v1839 = vsel %vm1774, %v1818, 0.0
  %v1840 = vadd.f32 %v1838, %v1839
  %1841 = vadd.xlane.f32.xlu0 %v1840
  %v1842 = vpop.xlane.xlu0 %1841
  %v1843 = vadd.f32 %v1819, %v1820
  %v1844 = vsel %vm1774, %v1821, 0.0
  %v1845 = vadd.f32 %v1843, %v1844
  %1846 = vadd.xlane.f32.xlu0 %v1845
  %v1847 = vpop.xlane.xlu0 %1846
  %v1848 = vadd.f32 %v1822, %v1823
  %v1849 = vsel %vm1774, %v1824, 0.0
  %v1850 = vadd.f32 %v1848, %v1849
  %1851 = vadd.xlane.f32.xlu0 %v1850
  %v1852 = vpop.xlane.xlu0 %1851
  %v1853 = vadd.f32 %v1825, %v1826
  %v1854 = vsel %vm1774, %v1827, 0.0
  %v1855 = vadd.f32 %v1853, %v1854
  %1856 = vadd.xlane.f32.xlu0 %v1855
  %v1857 = vpop.xlane.xlu0 %1856
  %v1858 = vmul.f32 %v1832, 0.00390625
  %v1859 = vmul.f32 %v1837, 0.00390625
  %v1860 = vmul.f32 %v1842, 0.00390625
  %v1861 = vmul.f32 %v1847, 0.00390625
  %v1862 = vmul.f32 %v1852, 0.00390625
  %v1863 = vmul.f32 %v1857, 0.00390625
  %v1864 = vmul.f32 %v1804, %v1804
  %v1865 = vmul.f32 %v1805, %v1805
  %v1866 = vmul.f32 %v1806, %v1806
  %v1867 = vmul.f32 %v1807, %v1807
  %v1868 = vmul.f32 %v1808, %v1808
  %v1869 = vmul.f32 %v1809, %v1809
  %v1870 = vsub.f32 %v1858, %v1864
  %v1871 = vsub.f32 %v1859, %v1865
  %v1872 = vsub.f32 %v1860, %v1866
  %v1873 = vsub.f32 %v1861, %v1867
  %v1874 = vsub.f32 %v1862, %v1868
  %v1875 = vsub.f32 %v1863, %v1869
  %v1876 = vsub.f32 %v1737, %v1804
  %v1877 = vsub.f32 %v1738, %v1804
  %v1878 = vsub.f32 %v1739, %v1804
  %v1879 = vsub.f32 %v1740, %v1805
  %v1880 = vsub.f32 %v1741, %v1805
  %v1881 = vsub.f32 %v1742, %v1805
  %v1882 = vsub.f32 %v1743, %v1806
  %v1883 = vsub.f32 %v1744, %v1806
  %v1884 = vsub.f32 %v1745, %v1806
  %v1885 = vsub.f32 %v1746, %v1807
  %v1886 = vsub.f32 %v1747, %v1807
  %v1887 = vsub.f32 %v1748, %v1807
  %v1888 = vsub.f32 %v1749, %v1808
  %v1889 = vsub.f32 %v1750, %v1808
  %v1890 = vsub.f32 %v1751, %v1808
  %v1891 = vsub.f32 %v1752, %v1809
  %v1892 = vsub.f32 %v1753, %v1809
  %v1893 = vsub.f32 %v1754, %v1809
  %v1894 = vadd.f32 %v1870, 1e-05
  %v1895 = vadd.f32 %v1871, 1e-05
  %v1896 = vadd.f32 %v1872, 1e-05
  %v1897 = vadd.f32 %v1873, 1e-05
  %v1898 = vadd.f32 %v1874, 1e-05
  %v1899 = vadd.f32 %v1875, 1e-05
  %v1900 = vrsqrt.pop %v1894
  %v1901 = vrsqrt.pop %v1895
  %v1902 = vrsqrt.pop %v1896
  %v1903 = vrsqrt.pop %v1897
  %v1904 = vrsqrt.pop %v1898
  %v1905 = vrsqrt.pop %v1899
  %v1906 = vmul.f32 %v1900, %v30
  %v1907 = vmul.f32 %v1901, %v31
  %v1908 = vmul.f32 %v1902, %v32
  %v1909 = vmul.f32 %v1903, %v33
  %v1910 = vmul.f32 %v1904, %v34
  %v1911 = vmul.f32 %v1905, %v35
  %1913 = vset.pattern.permute.xlu0 2
  %1914 = vperm.xlu0 %1913, %v1906
  %v1915 = vpop.permute.xlu0 %1914
  %1918 = vset.pattern.permute.xlu0 2
  %1919 = vperm.xlu0 %1918, %v1907
  %v1920 = vpop.permute.xlu0 %1919
  %1923 = vset.pattern.permute.xlu0 2
  %1924 = vperm.xlu0 %1923, %v1908
  %v1925 = vpop.permute.xlu0 %1924
  %1928 = vset.pattern.permute.xlu0 2
  %1929 = vperm.xlu0 %1928, %v1909
  %v1930 = vpop.permute.xlu0 %1929
  %1933 = vset.pattern.permute.xlu0 2
  %1934 = vperm.xlu0 %1933, %v1910
  %v1935 = vpop.permute.xlu0 %1934
  %1938 = vset.pattern.permute.xlu0 2
  %1939 = vperm.xlu0 %1938, %v1911
  %v1940 = vpop.permute.xlu0 %1939
  %v1942 = vmul.f32 %v1876, %v1915
  %v1943 = vmul.f32 %v1877, %v1915
  %v1944 = vmul.f32 %v1878, %v1915
  %v1945 = vmul.f32 %v1879, %v1920
  %v1946 = vmul.f32 %v1880, %v1920
  %v1947 = vmul.f32 %v1881, %v1920
  %v1948 = vmul.f32 %v1882, %v1925
  %v1949 = vmul.f32 %v1883, %v1925
  %v1950 = vmul.f32 %v1884, %v1925
  %v1951 = vmul.f32 %v1885, %v1930
  %v1952 = vmul.f32 %v1886, %v1930
  %v1953 = vmul.f32 %v1887, %v1930
  %v1954 = vmul.f32 %v1888, %v1935
  %v1955 = vmul.f32 %v1889, %v1935
  %v1956 = vmul.f32 %v1890, %v1935
  %v1957 = vmul.f32 %v1891, %v1940
  %v1958 = vmul.f32 %v1892, %v1940
  %v1959 = vmul.f32 %v1893, %v1940
  %1960 = vset.pattern.permute.xlu0 3
  %1961 = vperm.xlu0 %1960, %v30
  %v1962 = vpop.permute.xlu0 %1961
  %1964 = vset.pattern.permute.xlu0 3
  %1965 = vperm.xlu0 %1964, %v31
  %v1966 = vpop.permute.xlu0 %1965
  %1968 = vset.pattern.permute.xlu0 3
  %1969 = vperm.xlu0 %1968, %v32
  %v1970 = vpop.permute.xlu0 %1969
  %1972 = vset.pattern.permute.xlu0 3
  %1973 = vperm.xlu0 %1972, %v33
  %v1974 = vpop.permute.xlu0 %1973
  %1976 = vset.pattern.permute.xlu0 3
  %1977 = vperm.xlu0 %1976, %v34
  %v1978 = vpop.permute.xlu0 %1977
  %1980 = vset.pattern.permute.xlu0 3
  %1981 = vperm.xlu0 %1980, %v35
  %v1982 = vpop.permute.xlu0 %1981
  %v1984 = vadd.f32 %v1942, %v1962
  %v1985 = vadd.f32 %v1943, %v1962
  %v1986 = vadd.f32 %v1944, %v1962
  %v1987 = vadd.f32 %v1945, %v1966
  %v1988 = vadd.f32 %v1946, %v1966
  %v1989 = vadd.f32 %v1947, %v1966
  %v1990 = vadd.f32 %v1948, %v1970
  %v1991 = vadd.f32 %v1949, %v1970
  %v1992 = vadd.f32 %v1950, %v1970
  %v1993 = vadd.f32 %v1951, %v1974
  %v1994 = vadd.f32 %v1952, %v1974
  %v1995 = vadd.f32 %v1953, %v1974
  %v1996 = vadd.f32 %v1954, %v1978
  %v1997 = vadd.f32 %v1955, %v1978
  %v1998 = vadd.f32 %v1956, %v1978
  %v1999 = vadd.f32 %v1957, %v1982
  %v2000 = vadd.f32 %v1958, %v1982
  %v2001 = vadd.f32 %v1959, %v1982
  %vm2002 = vcmask 392192
  %v2004 = vsel %vm2002, %v29, 0
  %2006 = vmatprep.subr.mxu0 0.0
  %2007 = vmatpush1.msra.mxu0 0.0
  %2008 = vmatprep.subr.mxu0 0.0
  %2009 = vmatpush1.msra.mxu0 0.0
  %2010 = vmatprep.subr.mxu0 0.0
  %2011 = vmatpush1.msra.mxu0 0.0
  %2012 = vmatprep.subr.mxu0 0.0
  %2013 = vmatpush1.msra.mxu0 0.0
  %2014 = vmatprep.subr.mxu0 0.0
  %2015 = vmatpush1.msra.mxu0 0.0
  %2016 = vmatprep.subr.mxu0 0.0
  %2017 = vmatpush1.msra.mxu0 0.0
  %2018 = vmatprep.subr.mxu0 0.0
  %2019 = vmatpush1.msra.mxu0 0.0
  %2020 = vmatprep.subr.mxu0 0.0
  %2021 = vmatpush1.msra.mxu0 0.0
  %2022 = vmatprep.subr.mxu0 0.0
  %2023 = vmatpush1.msra.mxu0 0.0
  %2024 = vmatprep.subr.mxu0 0.0
  %2025 = vmatpush1.msra.mxu0 0.0
  %2026 = vmatprep.subr.mxu0 %v2000
  %2027 = vmatpush1.msra.mxu0 %v1999
  %2028 = vmatprep.subr.mxu0 %v1997
  %2029 = vmatpush1.msra.mxu0 %v1996
  %2030 = vmatprep.subr.mxu0 %v1994
  %2031 = vmatpush1.msra.mxu0 %v1993
  %2032 = vmatprep.subr.mxu0 %v1991
  %2033 = vmatpush1.msra.mxu0 %v1990
  %2034 = vmatprep.subr.mxu0 %v1988
  %2035 = vmatpush1.msra.mxu0 %v1987
  %2036 = vmatprep.subr.mxu0 %v1985
  %2037 = vmatpush1.msra.mxu0 %v1984
  %2038 = vmatprep.subr.mxu0 0.0
  %2039 = vmatpush2.msra.mxu0 0.0
  %2040 = vmatprep.subr.mxu0 0.0
  %2041 = vmatpush2.msra.mxu0 0.0
  %2042 = vmatprep.subr.mxu0 0.0
  %2043 = vmatpush2.msra.mxu0 0.0
  %2044 = vmatprep.subr.mxu0 0.0
  %2045 = vmatpush2.msra.mxu0 0.0
  %2046 = vmatprep.subr.mxu0 0.0
  %2047 = vmatpush2.msra.mxu0 0.0
  %2048 = vmatprep.subr.mxu0 0.0
  %2049 = vmatpush2.msra.mxu0 0.0
  %2050 = vmatprep.subr.mxu0 0.0
  %2051 = vmatpush2.msra.mxu0 0.0
  %2052 = vmatprep.subr.mxu0 0.0
  %2053 = vmatpush2.msra.mxu0 0.0
  %2054 = vmatprep.subr.mxu0 0.0
  %2055 = vmatpush2.msra.mxu0 0.0
  %2056 = vmatprep.subr.mxu0 0.0
  %2057 = vmatpush2.msra.mxu0 0.0
  %2058 = vmatprep.subr.mxu0 0.0
  %2059 = vmatpush2.msra.mxu0 0.0
  %2060 = vmatprep.subr.mxu0 0.0
  %2061 = vmatpush2.msra.mxu0 0.0
  %2062 = vmatprep.subr.mxu0 0.0
  %2063 = vmatpush2.msra.mxu0 0.0
  %2064 = vmatprep.subr.mxu0 0.0
  %2065 = vmatpush2.msra.mxu0 0.0
  %2066 = vmatprep.subr.mxu0 0.0
  %2067 = vmatpush2.msra.mxu0 0.0
  %2068 = vmatprep.subr.mxu0 0.0
  %2069 = vmatpush2.msra.mxu0 0.0
  %2070 = vmatprep.mubr.f32.mxu0 0.0
  %2071 = vmatmul.mubr.f32.gmra.mxu0 %v2004
  %v2072 = vpop.f32.mrf.mxu0
  %v2073 = vadd.f32 0.0, %v2072
  %v2074 = vpop.f32.mrf.mxu0
  %v2075 = vadd.f32 0.0, %v2074
  %2076 = vdwg.mxu0
  %2077 = vmatprep.subr.mxu0 0.0
  %2078 = vmatpush1.msra.mxu0 0.0
  %2079 = vmatprep.subr.mxu0 0.0
  %2080 = vmatpush1.msra.mxu0 0.0
  %2081 = vmatprep.subr.mxu0 0.0
  %2082 = vmatpush1.msra.mxu0 0.0
  %2083 = vmatprep.subr.mxu0 0.0
  %2084 = vmatpush1.msra.mxu0 0.0
  %2085 = vmatprep.subr.mxu0 0.0
  %2086 = vmatpush1.msra.mxu0 0.0
  %2087 = vmatprep.subr.mxu0 0.0
  %2088 = vmatpush1.msra.mxu0 0.0
  %2089 = vmatprep.subr.mxu0 0.0
  %2090 = vmatpush1.msra.mxu0 0.0
  %2091 = vmatprep.subr.mxu0 0.0
  %2092 = vmatpush1.msra.mxu0 0.0
  %2093 = vmatprep.subr.mxu0 0.0
  %2094 = vmatpush1.msra.mxu0 0.0
  %2095 = vmatprep.subr.mxu0 0.0
  %2096 = vmatpush1.msra.mxu0 0.0
  %2097 = vmatprep.subr.mxu0 0.0
  %2098 = vmatpush1.msra.mxu0 %v2001
  %2099 = vmatprep.subr.mxu0 0.0
  %2100 = vmatpush1.msra.mxu0 %v1998
  %2101 = vmatprep.subr.mxu0 0.0
  %2102 = vmatpush1.msra.mxu0 %v1995
  %2103 = vmatprep.subr.mxu0 0.0
  %2104 = vmatpush1.msra.mxu0 %v1992
  %2105 = vmatprep.subr.mxu0 0.0
  %2106 = vmatpush1.msra.mxu0 %v1989
  %2107 = vmatprep.subr.mxu0 0.0
  %2108 = vmatpush1.msra.mxu0 %v1986
  %2109 = vmatprep.subr.mxu0 0.0
  %2110 = vmatpush2.msra.mxu0 0.0
  %2111 = vmatprep.subr.mxu0 0.0
  %2112 = vmatpush2.msra.mxu0 0.0
  %2113 = vmatprep.subr.mxu0 0.0
  %2114 = vmatpush2.msra.mxu0 0.0
  %2115 = vmatprep.subr.mxu0 0.0
  %2116 = vmatpush2.msra.mxu0 0.0
  %2117 = vmatprep.subr.mxu0 0.0
  %2118 = vmatpush2.msra.mxu0 0.0
  %2119 = vmatprep.subr.mxu0 0.0
  %2120 = vmatpush2.msra.mxu0 0.0
  %2121 = vmatprep.subr.mxu0 0.0
  %2122 = vmatpush2.msra.mxu0 0.0
  %2123 = vmatprep.subr.mxu0 0.0
  %2124 = vmatpush2.msra.mxu0 0.0
  %2125 = vmatprep.subr.mxu0 0.0
  %2126 = vmatpush2.msra.mxu0 0.0
  %2127 = vmatprep.subr.mxu0 0.0
  %2128 = vmatpush2.msra.mxu0 0.0
  %2129 = vmatprep.subr.mxu0 0.0
  %2130 = vmatpush2.msra.mxu0 0.0
  %2131 = vmatprep.subr.mxu0 0.0
  %2132 = vmatpush2.msra.mxu0 0.0
  %2133 = vmatprep.subr.mxu0 0.0
  %2134 = vmatpush2.msra.mxu0 0.0
  %2135 = vmatprep.subr.mxu0 0.0
  %2136 = vmatpush2.msra.mxu0 0.0
  %2137 = vmatprep.subr.mxu0 0.0
  %2138 = vmatpush2.msra.mxu0 0.0
  %2139 = vmatprep.subr.mxu0 0.0
  %2140 = vmatpush2.msra.mxu0 0.0
  %2141 = vmatprep.mubr.f32.mxu0 0.0
  %2142 = vmatmul.mubr.f32.gmra.mxu0 %v2004
  %v2143 = vpop.f32.mrf.mxu0
  %v2144 = vadd.f32 0.0, %v2143
  %v2145 = vpop.f32.mrf.mxu0
  %2146 = vdwg.mxu0
  %v2147 = vmul.f32 %v2073, %v95
  %v2148 = vmul.f32 %v2075, %v96
  %v2149 = vmul.f32 %v2144, %v97
  %v2150 = vadd.f32 %v2147, %v2148
  %v2151 = vsel %vm1774, %v2149, 0.0
  %v2152 = vadd.f32 %v2150, %v2151
  %2153 = vadd.xlane.f32.xlu0 %v2152
  %v2154 = vpop.xlane.xlu0 %2153
  %v2155 = vmul.f32 %v2154, 0.00390625
  %v2156 = vmul.f32 %v2147, %v2073
  %v2157 = vmul.f32 %v2148, %v2075
  %v2158 = vmul.f32 %v2149, %v2144
  %v2159 = vadd.f32 %v2156, %v2157
  %v2160 = vsel %vm1774, %v2158, 0.0
  %v2161 = vadd.f32 %v2159, %v2160
  %2162 = vadd.xlane.f32.xlu0 %v2161
  %v2163 = vpop.xlane.xlu0 %2162
  %v2164 = vmul.f32 %v2163, 0.00390625
  %v2165 = vmul.f32 %v2155, %v2155
  %v2166 = vsub.f32 %v2164, %v2165
  %v2167 = vsub.f32 %v2073, %v2155
  %v2168 = vsub.f32 %v2075, %v2155
  %v2169 = vsub.f32 %v2144, %v2155
  %v2170 = vadd.f32 %v2166, 1e-05
  %v2171 = vrsqrt.pop %v2170
  %v2172 = vmul.f32 %v2171, %v36
  %2174 = vset.pattern.permute.xlu0 0
  %2175 = vperm.xlu0 %2174, %v2172
  %v2176 = vpop.permute.xlu0 %2175
  %v2178 = vmul.f32 %v2167, %v2176
  %v2179 = vmul.f32 %v2168, %v2176
  %v2180 = vmul.f32 %v2169, %v2176
  %2182 = vset.pattern.permute.xlu0 1
  %2183 = vperm.xlu0 %2182, %v36
  %v2184 = vpop.permute.xlu0 %2183
  %v2186 = vadd.f32 %v2178, %v2184
  %v2187 = vadd.f32 %v2179, %v2184
  %v2188 = vadd.f32 %v2180, %v2184
  %2192 = vrot.lane.b32.xlu0 %v20, 109
  %v2193 = vpop.permute.xlu0 %2192
  %2194 = vrot.lane.b32.xlu0 %v21, 109
  %v2195 = vpop.permute.xlu0 %2194
  %2196 = vrot.lane.b32.xlu0 %v22, 109
  %v2197 = vpop.permute.xlu0 %2196
  %v2198 = vsel %vm1126, %v2193, %v2195
  %v2199 = vsel %vm1126, %v2195, %v2197
  %v2203 = vadd.f32 %v2186, %v2198
  %v2204 = vadd.f32 %v2187, %v2199
  %v2205 = vadd.f32 %v2188, %v2197
  %2207 = vrot.lane.b32.xlu0 %v2203, 110
  %v2208 = vpop.permute.xlu0 %2207
  %2210 = vrot.lane.b32.xlu0 %v2203, 92
  %v2211 = vpop.permute.xlu0 %2210
  %2213 = vrot.lane.b32.xlu0 %v2203, 74
  %v2214 = vpop.permute.xlu0 %2213
  %2216 = vrot.lane.b32.xlu0 %v2203, 56
  %v2217 = vpop.permute.xlu0 %2216
  %2219 = vrot.lane.b32.xlu0 %v2203, 38
  %v2220 = vpop.permute.xlu0 %2219
  %2222 = vrot.lane.b32.xlu0 %v2203, 20
  %v2223 = vpop.permute.xlu0 %2222
  %2226 = vrot.lane.b32.xlu0 %v2203, 2
  %v2227 = vpop.permute.xlu0 %2226
  %2228 = vrot.lane.b32.xlu0 %v2204, 2
  %v2229 = vpop.permute.xlu0 %2228
  %vm2230 = vcmask 15360
  %v2231 = vsel %vm2230, %v2227, %v2229
  %2233 = vrot.lane.b32.xlu0 %v2204, 112
  %v2234 = vpop.permute.xlu0 %2233
  %2236 = vrot.lane.b32.xlu0 %v2204, 94
  %v2237 = vpop.permute.xlu0 %2236
  %2239 = vrot.lane.b32.xlu0 %v2204, 76
  %v2240 = vpop.permute.xlu0 %2239
  %2242 = vrot.lane.b32.xlu0 %v2204, 58
  %v2243 = vpop.permute.xlu0 %2242
  %2245 = vrot.lane.b32.xlu0 %v2204, 40
  %v2246 = vpop.permute.xlu0 %2245
  %2248 = vrot.lane.b32.xlu0 %v2204, 22
  %v2249 = vpop.permute.xlu0 %2248
  %2252 = vrot.lane.b32.xlu0 %v2204, 4
  %v2253 = vpop.permute.xlu0 %2252
  %2254 = vrot.lane.b32.xlu0 %v2205, 4
  %v2255 = vpop.permute.xlu0 %2254
  %vm2256 = vcmask 31744
  %v2257 = vsel %vm2256, %v2253, %v2255
  %2259 = vrot.lane.b32.xlu0 %v2205, 114
  %v2260 = vpop.permute.xlu0 %2259
  %v2262 = vcombine.low %v2203, %v2211
  %v2263 = vcombine.high %v2203, %v2211
  %v2265 = vunpack.c.l.s4 1983009808
  %v2266 = vunpack.c.0.s8 %v2265
  %v2267 = vlaneseq
  %v2268 = vshrl.u32 %v2267, 7
  %v2269 = vsub.s32 %v2266, %v2268
  %v2270 = vrot.slane %v2262, %v2269
  %v2272 = vunpack.c.l.s4 1983009808
  %v2273 = vunpack.c.0.s8 %v2272
  %v2274 = vlaneseq
  %v2275 = vshrl.u32 %v2274, 7
  %v2276 = vsub.s32 %v2273, %v2275
  %v2277 = vrot.slane %v2263, %v2276
  %v2278 = vcombine.low %v2208, %v2214
  %v2279 = vcombine.high %v2208, %v2214
  %v2281 = vunpack.c.l.s4 1983009808
  %v2282 = vunpack.c.0.s8 %v2281
  %v2283 = vlaneseq
  %v2284 = vshrl.u32 %v2283, 7
  %v2285 = vsub.s32 %v2282, %v2284
  %v2286 = vrot.slane %v2278, %v2285
  %v2288 = vunpack.c.l.s4 1983009808
  %v2289 = vunpack.c.0.s8 %v2288
  %v2290 = vlaneseq
  %v2291 = vshrl.u32 %v2290, 7
  %v2292 = vsub.s32 %v2289, %v2291
  %v2293 = vrot.slane %v2279, %v2292
  %v2294 = vcombine.low %v2217, %v2223
  %v2295 = vcombine.high %v2217, %v2223
  %v2297 = vunpack.c.l.s4 1983009808
  %v2298 = vunpack.c.0.s8 %v2297
  %v2299 = vlaneseq
  %v2300 = vshrl.u32 %v2299, 7
  %v2301 = vsub.s32 %v2298, %v2300
  %v2302 = vrot.slane %v2294, %v2301
  %v2304 = vunpack.c.l.s4 1983009808
  %v2305 = vunpack.c.0.s8 %v2304
  %v2306 = vlaneseq
  %v2307 = vshrl.u32 %v2306, 7
  %v2308 = vsub.s32 %v2305, %v2307
  %v2309 = vrot.slane %v2295, %v2308
  %v2310 = vcombine.low %v2220, %v2231
  %v2311 = vcombine.high %v2220, %v2231
  %v2313 = vunpack.c.l.s4 1983009808
  %v2314 = vunpack.c.0.s8 %v2313
  %v2315 = vlaneseq
  %v2316 = vshrl.u32 %v2315, 7
  %v2317 = vsub.s32 %v2314, %v2316
  %v2318 = vrot.slane %v2310, %v2317
  %v2320 = vunpack.c.l.s4 1983009808
  %v2321 = vunpack.c.0.s8 %v2320
  %v2322 = vlaneseq
  %v2323 = vshrl.u32 %v2322, 7
  %v2324 = vsub.s32 %v2321, %v2323
  %v2325 = vrot.slane %v2311, %v2324
  %v2326 = vcombine.low %v2270, %v2286
  %v2327 = vcombine.high %v2270, %v2286
  %v2329 = vunpack.c.l.s4 1934713408
  %v2330 = vunpack.c.0.s8 %v2329
  %v2331 = vlaneseq
  %v2332 = vshrl.u32 %v2331, 7
  %v2333 = vsub.s32 %v2330, %v2332
  %v2334 = vrot.slane %v2326, %v2333
  %v2336 = vunpack.c.l.s4 1934713408
  %v2337 = vunpack.c.0.s8 %v2336
  %v2338 = vlaneseq
  %v2339 = vshrl.u32 %v2338, 7
  %v2340 = vsub.s32 %v2337, %v2339
  %v2341 = vrot.slane %v2327, %v2340
  %v2342 = vcombine.low %v2277, %v2293
  %v2343 = vcombine.high %v2277, %v2293
  %v2345 = vunpack.c.l.s4 1934713408
  %v2346 = vunpack.c.0.s8 %v2345
  %v2347 = vlaneseq
  %v2348 = vshrl.u32 %v2347, 7
  %v2349 = vsub.s32 %v2346, %v2348
  %v2350 = vrot.slane %v2342, %v2349
  %v2352 = vunpack.c.l.s4 1934713408
  %v2353 = vunpack.c.0.s8 %v2352
  %v2354 = vlaneseq
  %v2355 = vshrl.u32 %v2354, 7
  %v2356 = vsub.s32 %v2353, %v2355
  %v2357 = vrot.slane %v2343, %v2356
  %v2358 = vcombine.low %v2302, %v2318
  %v2359 = vcombine.high %v2302, %v2318
  %v2361 = vunpack.c.l.s4 1934713408
  %v2362 = vunpack.c.0.s8 %v2361
  %v2363 = vlaneseq
  %v2364 = vshrl.u32 %v2363, 7
  %v2365 = vsub.s32 %v2362, %v2364
  %v2366 = vrot.slane %v2358, %v2365
  %v2368 = vunpack.c.l.s4 1934713408
  %v2369 = vunpack.c.0.s8 %v2368
  %v2370 = vlaneseq
  %v2371 = vshrl.u32 %v2370, 7
  %v2372 = vsub.s32 %v2369, %v2371
  %v2373 = vrot.slane %v2359, %v2372
  %v2374 = vcombine.low %v2309, %v2325
  %v2375 = vcombine.high %v2309, %v2325
  %v2377 = vunpack.c.l.s4 1934713408
  %v2378 = vunpack.c.0.s8 %v2377
  %v2379 = vlaneseq
  %v2380 = vshrl.u32 %v2379, 7
  %v2381 = vsub.s32 %v2378, %v2380
  %v2382 = vrot.slane %v2374, %v2381
  %v2384 = vunpack.c.l.s4 1934713408
  %v2385 = vunpack.c.0.s8 %v2384
  %v2386 = vlaneseq
  %v2387 = vshrl.u32 %v2386, 7
  %v2388 = vsub.s32 %v2385, %v2387
  %v2389 = vrot.slane %v2375, %v2388
  %v2390 = vcombine.low %v2334, %v2366
  %v2391 = vcombine.high %v2334, %v2366
  %v2392 = vcombine.low %v2341, %v2373
  %v2393 = vcombine.high %v2341, %v2373
  %v2394 = vcombine.low %v2350, %v2382
  %v2395 = vcombine.high %v2350, %v2382
  %v2396 = vcombine.low %v2357, %v2389
  %v2397 = vcombine.high %v2357, %v2389
  %v2398 = vcombine.low %v2234, %v2240
  %v2399 = vcombine.high %v2234, %v2240
  %v2401 = vunpack.c.l.s4 1983009808
  %v2402 = vunpack.c.0.s8 %v2401
  %v2403 = vlaneseq
  %v2404 = vshrl.u32 %v2403, 7
  %v2405 = vsub.s32 %v2402, %v2404
  %v2406 = vrot.slane %v2398, %v2405
  %v2408 = vunpack.c.l.s4 1983009808
  %v2409 = vunpack.c.0.s8 %v2408
  %v2410 = vlaneseq
  %v2411 = vshrl.u32 %v2410, 7
  %v2412 = vsub.s32 %v2409, %v2411
  %v2413 = vrot.slane %v2399, %v2412
  %v2414 = vcombine.low %v2237, %v2243
  %v2415 = vcombine.high %v2237, %v2243
  %v2417 = vunpack.c.l.s4 1983009808
  %v2418 = vunpack.c.0.s8 %v2417
  %v2419 = vlaneseq
  %v2420 = vshrl.u32 %v2419, 7
  %v2421 = vsub.s32 %v2418, %v2420
  %v2422 = vrot.slane %v2414, %v2421
  %v2424 = vunpack.c.l.s4 1983009808
  %v2425 = vunpack.c.0.s8 %v2424
  %v2426 = vlaneseq
  %v2427 = vshrl.u32 %v2426, 7
  %v2428 = vsub.s32 %v2425, %v2427
  %v2429 = vrot.slane %v2415, %v2428
  %v2430 = vcombine.low %v2246, %v2257
  %v2431 = vcombine.high %v2246, %v2257
  %v2433 = vunpack.c.l.s4 1983009808
  %v2434 = vunpack.c.0.s8 %v2433
  %v2435 = vlaneseq
  %v2436 = vshrl.u32 %v2435, 7
  %v2437 = vsub.s32 %v2434, %v2436
  %v2438 = vrot.slane %v2430, %v2437
  %v2440 = vunpack.c.l.s4 1983009808
  %v2441 = vunpack.c.0.s8 %v2440
  %v2442 = vlaneseq
  %v2443 = vshrl.u32 %v2442, 7
  %v2444 = vsub.s32 %v2441, %v2443
  %v2445 = vrot.slane %v2431, %v2444
  %v2446 = vcombine.low %v2249, %v2260
  %v2447 = vcombine.high %v2249, %v2260
  %v2449 = vunpack.c.l.s4 1983009808
  %v2450 = vunpack.c.0.s8 %v2449
  %v2451 = vlaneseq
  %v2452 = vshrl.u32 %v2451, 7
  %v2453 = vsub.s32 %v2450, %v2452
  %v2454 = vrot.slane %v2446, %v2453
  %v2456 = vunpack.c.l.s4 1983009808
  %v2457 = vunpack.c.0.s8 %v2456
  %v2458 = vlaneseq
  %v2459 = vshrl.u32 %v2458, 7
  %v2460 = vsub.s32 %v2457, %v2459
  %v2461 = vrot.slane %v2447, %v2460
  %v2462 = vcombine.low %v2406, %v2422
  %v2463 = vcombine.high %v2406, %v2422
  %v2465 = vunpack.c.l.s4 1934713408
  %v2466 = vunpack.c.0.s8 %v2465
  %v2467 = vlaneseq
  %v2468 = vshrl.u32 %v2467, 7
  %v2469 = vsub.s32 %v2466, %v2468
  %v2470 = vrot.slane %v2462, %v2469
  %v2472 = vunpack.c.l.s4 1934713408
  %v2473 = vunpack.c.0.s8 %v2472
  %v2474 = vlaneseq
  %v2475 = vshrl.u32 %v2474, 7
  %v2476 = vsub.s32 %v2473, %v2475
  %v2477 = vrot.slane %v2463, %v2476
  %v2478 = vcombine.low %v2413, %v2429
  %v2479 = vcombine.high %v2413, %v2429
  %v2481 = vunpack.c.l.s4 1934713408
  %v2482 = vunpack.c.0.s8 %v2481
  %v2483 = vlaneseq
  %v2484 = vshrl.u32 %v2483, 7
  %v2485 = vsub.s32 %v2482, %v2484
  %v2486 = vrot.slane %v2478, %v2485
  %v2488 = vunpack.c.l.s4 1934713408
  %v2489 = vunpack.c.0.s8 %v2488
  %v2490 = vlaneseq
  %v2491 = vshrl.u32 %v2490, 7
  %v2492 = vsub.s32 %v2489, %v2491
  %v2493 = vrot.slane %v2479, %v2492
  %v2494 = vcombine.low %v2438, %v2454
  %v2495 = vcombine.high %v2438, %v2454
  %v2497 = vunpack.c.l.s4 1934713408
  %v2498 = vunpack.c.0.s8 %v2497
  %v2499 = vlaneseq
  %v2500 = vshrl.u32 %v2499, 7
  %v2501 = vsub.s32 %v2498, %v2500
  %v2502 = vrot.slane %v2494, %v2501
  %v2504 = vunpack.c.l.s4 1934713408
  %v2505 = vunpack.c.0.s8 %v2504
  %v2506 = vlaneseq
  %v2507 = vshrl.u32 %v2506, 7
  %v2508 = vsub.s32 %v2505, %v2507
  %v2509 = vrot.slane %v2495, %v2508
  %v2510 = vcombine.low %v2445, %v2461
  %v2511 = vcombine.high %v2445, %v2461
  %v2513 = vunpack.c.l.s4 1934713408
  %v2514 = vunpack.c.0.s8 %v2513
  %v2515 = vlaneseq
  %v2516 = vshrl.u32 %v2515, 7
  %v2517 = vsub.s32 %v2514, %v2516
  %v2518 = vrot.slane %v2510, %v2517
  %v2520 = vunpack.c.l.s4 1934713408
  %v2521 = vunpack.c.0.s8 %v2520
  %v2522 = vlaneseq
  %v2523 = vshrl.u32 %v2522, 7
  %v2524 = vsub.s32 %v2521, %v2523
  %v2525 = vrot.slane %v2511, %v2524
  %v2526 = vcombine.low %v2470, %v2502
  %v2527 = vcombine.high %v2470, %v2502
  %v2528 = vcombine.low %v2477, %v2509
  %v2529 = vcombine.high %v2477, %v2509
  %v2530 = vcombine.low %v2486, %v2518
  %v2531 = vcombine.high %v2486, %v2518
  %v2532 = vcombine.low %v2493, %v2525
  %v2533 = vcombine.high %v2493, %v2525
  %v2534 = vcombine.low %v2390, %v2392
  %v2535 = vcombine.high %v2390, %v2392
  %v2537 = vunpack.c.l.s4 1983009808
  %v2538 = vunpack.c.0.s8 %v2537
  %v2539 = vlaneseq
  %v2540 = vshrl.u32 %v2539, 7
  %v2541 = vsub.s32 %v2538, %v2540
  %v2542 = vrot.slane %v2534, %v2541
  %v2544 = vunpack.c.l.s4 1983009808
  %v2545 = vunpack.c.0.s8 %v2544
  %v2546 = vlaneseq
  %v2547 = vshrl.u32 %v2546, 7
  %v2548 = vsub.s32 %v2545, %v2547
  %v2549 = vrot.slane %v2535, %v2548
  %v2550 = vcombine.low %v2391, %v2393
  %v2551 = vcombine.high %v2391, %v2393
  %v2553 = vunpack.c.l.s4 1983009808
  %v2554 = vunpack.c.0.s8 %v2553
  %v2555 = vlaneseq
  %v2556 = vshrl.u32 %v2555, 7
  %v2557 = vsub.s32 %v2554, %v2556
  %v2558 = vrot.slane %v2550, %v2557
  %v2560 = vunpack.c.l.s4 1983009808
  %v2561 = vunpack.c.0.s8 %v2560
  %v2562 = vlaneseq
  %v2563 = vshrl.u32 %v2562, 7
  %v2564 = vsub.s32 %v2561, %v2563
  %v2565 = vrot.slane %v2551, %v2564
  %v2566 = vcombine.low %v2394, %v2396
  %v2567 = vcombine.high %v2394, %v2396
  %v2569 = vunpack.c.l.s4 1983009808
  %v2570 = vunpack.c.0.s8 %v2569
  %v2571 = vlaneseq
  %v2572 = vshrl.u32 %v2571, 7
  %v2573 = vsub.s32 %v2570, %v2572
  %v2574 = vrot.slane %v2566, %v2573
  %v2576 = vunpack.c.l.s4 1983009808
  %v2577 = vunpack.c.0.s8 %v2576
  %v2578 = vlaneseq
  %v2579 = vshrl.u32 %v2578, 7
  %v2580 = vsub.s32 %v2577, %v2579
  %v2581 = vrot.slane %v2567, %v2580
  %v2582 = vcombine.low %v2395, %v2397
  %v2583 = vcombine.high %v2395, %v2397
  %v2585 = vunpack.c.l.s4 1983009808
  %v2586 = vunpack.c.0.s8 %v2585
  %v2587 = vlaneseq
  %v2588 = vshrl.u32 %v2587, 7
  %v2589 = vsub.s32 %v2586, %v2588
  %v2590 = vrot.slane %v2582, %v2589
  %v2592 = vunpack.c.l.s4 1983009808
  %v2593 = vunpack.c.0.s8 %v2592
  %v2594 = vlaneseq
  %v2595 = vshrl.u32 %v2594, 7
  %v2596 = vsub.s32 %v2593, %v2595
  %v2597 = vrot.slane %v2583, %v2596
  %v2598 = vcombine.low %v2542, %v2558
  %v2599 = vcombine.high %v2542, %v2558
  %v2601 = vunpack.c.l.s4 1934713408
  %v2602 = vunpack.c.0.s8 %v2601
  %v2603 = vlaneseq
  %v2604 = vshrl.u32 %v2603, 7
  %v2605 = vsub.s32 %v2602, %v2604
  %v2606 = vrot.slane %v2598, %v2605
  %v2608 = vunpack.c.l.s4 1934713408
  %v2609 = vunpack.c.0.s8 %v2608
  %v2610 = vlaneseq
  %v2611 = vshrl.u32 %v2610, 7
  %v2612 = vsub.s32 %v2609, %v2611
  %v2613 = vrot.slane %v2599, %v2612
  %v2614 = vcombine.low %v2549, %v2565
  %v2615 = vcombine.high %v2549, %v2565
  %v2617 = vunpack.c.l.s4 1934713408
  %v2618 = vunpack.c.0.s8 %v2617
  %v2619 = vlaneseq
  %v2620 = vshrl.u32 %v2619, 7
  %v2621 = vsub.s32 %v2618, %v2620
  %v2622 = vrot.slane %v2614, %v2621
  %v2624 = vunpack.c.l.s4 1934713408
  %v2625 = vunpack.c.0.s8 %v2624
  %v2626 = vlaneseq
  %v2627 = vshrl.u32 %v2626, 7
  %v2628 = vsub.s32 %v2625, %v2627
  %v2629 = vrot.slane %v2615, %v2628
  %v2630 = vcombine.low %v2574, %v2590
  %v2631 = vcombine.high %v2574, %v2590
  %v2633 = vunpack.c.l.s4 1934713408
  %v2634 = vunpack.c.0.s8 %v2633
  %v2635 = vlaneseq
  %v2636 = vshrl.u32 %v2635, 7
  %v2637 = vsub.s32 %v2634, %v2636
  %v2638 = vrot.slane %v2630, %v2637
  %v2640 = vunpack.c.l.s4 1934713408
  %v2641 = vunpack.c.0.s8 %v2640
  %v2642 = vlaneseq
  %v2643 = vshrl.u32 %v2642, 7
  %v2644 = vsub.s32 %v2641, %v2643
  %v2645 = vrot.slane %v2631, %v2644
  %v2646 = vcombine.low %v2581, %v2597
  %v2647 = vcombine.high %v2581, %v2597
  %v2649 = vunpack.c.l.s4 1934713408
  %v2650 = vunpack.c.0.s8 %v2649
  %v2651 = vlaneseq
  %v2652 = vshrl.u32 %v2651, 7
  %v2653 = vsub.s32 %v2650, %v2652
  %v2654 = vrot.slane %v2646, %v2653
  %v2656 = vunpack.c.l.s4 1934713408
  %v2657 = vunpack.c.0.s8 %v2656
  %v2658 = vlaneseq
  %v2659 = vshrl.u32 %v2658, 7
  %v2660 = vsub.s32 %v2657, %v2659
  %v2661 = vrot.slane %v2647, %v2660
  %v2662 = vcombine.low %v2606, %v2638
  %v2663 = vcombine.high %v2606, %v2638
  %v2664 = vcombine.low %v2613, %v2645
  %v2665 = vcombine.high %v2613, %v2645
  %v2666 = vcombine.low %v2622, %v2654
  %v2667 = vcombine.high %v2622, %v2654
  %v2668 = vcombine.low %v2629, %v2661
  %v2669 = vcombine.high %v2629, %v2661
  %v2670 = vcombine.low %v2526, %v2528
  %v2671 = vcombine.high %v2526, %v2528
  %v2673 = vunpack.c.l.s4 1983009808
  %v2674 = vunpack.c.0.s8 %v2673
  %v2675 = vlaneseq
  %v2676 = vshrl.u32 %v2675, 7
  %v2677 = vsub.s32 %v2674, %v2676
  %v2678 = vrot.slane %v2670, %v2677
  %v2680 = vunpack.c.l.s4 1983009808
  %v2681 = vunpack.c.0.s8 %v2680
  %v2682 = vlaneseq
  %v2683 = vshrl.u32 %v2682, 7
  %v2684 = vsub.s32 %v2681, %v2683
  %v2685 = vrot.slane %v2671, %v2684
  %v2686 = vcombine.low %v2527, %v2529
  %v2687 = vcombine.high %v2527, %v2529
  %v2689 = vunpack.c.l.s4 1983009808
  %v2690 = vunpack.c.0.s8 %v2689
  %v2691 = vlaneseq
  %v2692 = vshrl.u32 %v2691, 7
  %v2693 = vsub.s32 %v2690, %v2692
  %v2694 = vrot.slane %v2686, %v2693
  %v2696 = vunpack.c.l.s4 1983009808
  %v2697 = vunpack.c.0.s8 %v2696
  %v2698 = vlaneseq
  %v2699 = vshrl.u32 %v2698, 7
  %v2700 = vsub.s32 %v2697, %v2699
  %v2701 = vrot.slane %v2687, %v2700
  %v2702 = vcombine.low %v2530, %v2532
  %v2703 = vcombine.high %v2530, %v2532
  %v2705 = vunpack.c.l.s4 1983009808
  %v2706 = vunpack.c.0.s8 %v2705
  %v2707 = vlaneseq
  %v2708 = vshrl.u32 %v2707, 7
  %v2709 = vsub.s32 %v2706, %v2708
  %v2710 = vrot.slane %v2702, %v2709
  %v2712 = vunpack.c.l.s4 1983009808
  %v2713 = vunpack.c.0.s8 %v2712
  %v2714 = vlaneseq
  %v2715 = vshrl.u32 %v2714, 7
  %v2716 = vsub.s32 %v2713, %v2715
  %v2717 = vrot.slane %v2703, %v2716
  %v2718 = vcombine.low %v2531, %v2533
  %v2719 = vcombine.high %v2531, %v2533
  %v2721 = vunpack.c.l.s4 1983009808
  %v2722 = vunpack.c.0.s8 %v2721
  %v2723 = vlaneseq
  %v2724 = vshrl.u32 %v2723, 7
  %v2725 = vsub.s32 %v2722, %v2724
  %v2726 = vrot.slane %v2718, %v2725
  %v2728 = vunpack.c.l.s4 1983009808
  %v2729 = vunpack.c.0.s8 %v2728
  %v2730 = vlaneseq
  %v2731 = vshrl.u32 %v2730, 7
  %v2732 = vsub.s32 %v2729, %v2731
  %v2733 = vrot.slane %v2719, %v2732
  %v2734 = vcombine.low %v2678, %v2694
  %v2735 = vcombine.high %v2678, %v2694
  %v2737 = vunpack.c.l.s4 1934713408
  %v2738 = vunpack.c.0.s8 %v2737
  %v2739 = vlaneseq
  %v2740 = vshrl.u32 %v2739, 7
  %v2741 = vsub.s32 %v2738, %v2740
  %v2742 = vrot.slane %v2734, %v2741
  %v2744 = vunpack.c.l.s4 1934713408
  %v2745 = vunpack.c.0.s8 %v2744
  %v2746 = vlaneseq
  %v2747 = vshrl.u32 %v2746, 7
  %v2748 = vsub.s32 %v2745, %v2747
  %v2749 = vrot.slane %v2735, %v2748
  %v2750 = vcombine.low %v2685, %v2701
  %v2751 = vcombine.high %v2685, %v2701
  %v2753 = vunpack.c.l.s4 1934713408
  %v2754 = vunpack.c.0.s8 %v2753
  %v2755 = vlaneseq
  %v2756 = vshrl.u32 %v2755, 7
  %v2757 = vsub.s32 %v2754, %v2756
  %v2758 = vrot.slane %v2750, %v2757
  %v2760 = vunpack.c.l.s4 1934713408
  %v2761 = vunpack.c.0.s8 %v2760
  %v2762 = vlaneseq
  %v2763 = vshrl.u32 %v2762, 7
  %v2764 = vsub.s32 %v2761, %v2763
  %v2765 = vrot.slane %v2751, %v2764
  %v2766 = vcombine.low %v2710, %v2726
  %v2767 = vcombine.high %v2710, %v2726
  %v2769 = vunpack.c.l.s4 1934713408
  %v2770 = vunpack.c.0.s8 %v2769
  %v2771 = vlaneseq
  %v2772 = vshrl.u32 %v2771, 7
  %v2773 = vsub.s32 %v2770, %v2772
  %v2774 = vrot.slane %v2766, %v2773
  %v2776 = vunpack.c.l.s4 1934713408
  %v2777 = vunpack.c.0.s8 %v2776
  %v2778 = vlaneseq
  %v2779 = vshrl.u32 %v2778, 7
  %v2780 = vsub.s32 %v2777, %v2779
  %v2781 = vrot.slane %v2767, %v2780
  %v2782 = vcombine.low %v2717, %v2733
  %v2783 = vcombine.high %v2717, %v2733
  %v2785 = vunpack.c.l.s4 1934713408
  %v2786 = vunpack.c.0.s8 %v2785
  %v2787 = vlaneseq
  %v2788 = vshrl.u32 %v2787, 7
  %v2789 = vsub.s32 %v2786, %v2788
  %v2790 = vrot.slane %v2782, %v2789
  %v2792 = vunpack.c.l.s4 1934713408
  %v2793 = vunpack.c.0.s8 %v2792
  %v2794 = vlaneseq
  %v2795 = vshrl.u32 %v2794, 7
  %v2796 = vsub.s32 %v2793, %v2795
  %v2797 = vrot.slane %v2783, %v2796
  %v2798 = vcombine.low %v2742, %v2774
  %v2799 = vcombine.high %v2742, %v2774
  %v2800 = vcombine.low %v2749, %v2781
  %v2801 = vcombine.high %v2749, %v2781
  %v2802 = vcombine.low %v2758, %v2790
  %v2803 = vcombine.high %v2758, %v2790
  %v2804 = vcombine.low %v2765, %v2797
  %v2805 = vcombine.high %v2765, %v2797
  %2807 = vrot.lane.b32.xlu0 %v2663, 16
  %v2808 = vpop.permute.xlu0 %2807
  %2811 = vrot.lane.b32.xlu0 %v2664, 32
  %v2812 = vpop.permute.xlu0 %2811
  %2815 = vrot.lane.b32.xlu0 %v2665, 48
  %v2816 = vpop.permute.xlu0 %2815
  %2819 = vrot.lane.b32.xlu0 %v2666, 64
  %v2820 = vpop.permute.xlu0 %2819
  %2823 = vrot.lane.b32.xlu0 %v2667, 80
  %v2824 = vpop.permute.xlu0 %2823
  %2827 = vrot.lane.b32.xlu0 %v2668, 96
  %v2828 = vpop.permute.xlu0 %2827
  %2831 = vrot.lane.b32.xlu0 %v2669, 112
  %v2832 = vpop.permute.xlu0 %2831
  %2835 = vrot.lane.b32.xlu0 %v2799, 16
  %v2836 = vpop.permute.xlu0 %2835
  %2839 = vrot.lane.b32.xlu0 %v2800, 32
  %v2840 = vpop.permute.xlu0 %2839
  %2843 = vrot.lane.b32.xlu0 %v2801, 48
  %v2844 = vpop.permute.xlu0 %2843
  %2847 = vrot.lane.b32.xlu0 %v2802, 64
  %v2848 = vpop.permute.xlu0 %2847
  %2851 = vrot.lane.b32.xlu0 %v2803, 80
  %v2852 = vpop.permute.xlu0 %2851
  %2855 = vrot.lane.b32.xlu0 %v2804, 96
  %v2856 = vpop.permute.xlu0 %2855
  %2859 = vrot.lane.b32.xlu0 %v2805, 112
  %v2860 = vpop.permute.xlu0 %2859
  %vm2862 = vcmask 130048
  %v2863 = vsel %vm2862, %v2662, %v2808
  %v2864 = vsel %vm1774, %v2863, %v2812
  %v2865 = vsel %vm2002, %v2864, %v2816
  %vm2866 = vcmask 523264
  %v2867 = vsel %vm2866, %v2865, %v2820
  %vm2868 = vcmask 654336
  %v2869 = vsel %vm2868, %v2867, %v2824
  %vm2870 = vcmask 785408
  %v2871 = vsel %vm2870, %v2869, %v2828
  %vm2872 = vcmask 916480
  %v2873 = vsel %vm2872, %v2871, %v2832
  %v2874 = vsel %vm2862, %v2798, %v2836
  %v2875 = vsel %vm1774, %v2874, %v2840
  %v2876 = vsel %vm2002, %v2875, %v2844
  %v2877 = vsel %vm2866, %v2876, %v2848
  %v2878 = vsel %vm2868, %v2877, %v2852
  %v2879 = vsel %vm2870, %v2878, %v2856
  %v2880 = vsel %vm2872, %v2879, %v2860
  %2881 = vst [vmem:[%s5] sm:$0xff] %v2873
  %2882 = vst [vmem:[%s5 + $0x8] sm:$0xff] %v2880
  // Predicated region
  $region22: #{mobile_v2_block.1} parent=0 // pred_check
    _
  $region23: #{mobile_v2_block.1} parent=0 // pred_check_branch
    %2884 = sbr.rel (0) target = $region25
  $region24: #{mobile_v2_block.1} parent=0 // pred_region
    _
  $region25: #{mobile_v2_block.1} parent=0 // pred_fallthru
    _
  // Predicated region
  $region26: #{mobile_v2_block.1} parent=0 // pred_check
    _
  $region27: #{mobile_v2_block.1} parent=0 // pred_check_branch
    %2886 = sbr.rel (0) target = $region29
  $region28: #{mobile_v2_block.1} parent=0 // pred_region
    _
  $region29: #{mobile_v2_block.1} parent=0 // pred_fallthru
    _

</llo_original>
